<compile_context>
chip_gen: v6e
topology: v6e:2x2x1
jax: 0.10.0
libtpu: 0.0.40
codegen_flags: <defaults>
</compile_context>

<pallas_src>
import functools

import jax
import jax.numpy as jnp
from jax import lax
from jax.experimental import pallas as pl
from jax.experimental.pallas import tpu as pltpu

MID = 128          # conv1 output channels (fixed by the module)
EPS = 1e-5


def _dense_block_kernel(H, W, x_ref, s1_ref, t1_ref, w1_ref, b1_ref,
                        w2_ref, b2_ref, o_ref, t_ref):
    """One image per grid step.

    x_ref : (1, Cin, H*W)    f32   s1/t1 : (Cin, 1) f32   (BN1 folded)
    w1_ref: (MID, Cin)       bf16  b1_ref: (MID, 1) f32   (conv1 with BN2 folded)
    w2_ref: (9*G, MID)       bf16  b2_ref: (G, 1)   f32
    o_ref : (1, Cin+G, H*W)  f32   t_ref : (9*G, H*W) f32 VMEM scratch
    """
    HW = H * W
    Cin = x_ref.shape[1]
    G = o_ref.shape[1] - Cin

    # ---- fused torch.cat([x, out], 1): passthrough copy of x ----------------
    x = x_ref[0]                                             # (Cin, HW) f32
    o_ref[0, :Cin, :] = x

    # ---- BN1 (folded scale/shift) + ReLU  (VPU, f32) -------------------------
    y = jnp.maximum(x * s1_ref[...] + t1_ref[...], 0.0)

    # ---- conv1 (1x1) with BN2 folded in, + ReLU (MXU) ------------------------
    # K = Cin is tiny; this matmul is negligible next to the 3x3 conv.
    z = jnp.dot(w1_ref[...], y.astype(jnp.bfloat16),
                preferred_element_type=jnp.float32) + b1_ref[...]
    z = jnp.maximum(z, 0.0).astype(jnp.bfloat16)             # (MID, HW)

    # ---- conv2 (3x3, pad=1): ONE fused matmul for all nine taps --------------
    # t_ref[t*G + g, p] = sum_c w2[g, c, dy, dx] * z[c, p],   t = dy*3 + dx
    t_ref[...] = jnp.dot(w2_ref[...], z, preferred_element_type=jnp.float32)

    # Pixel-index boundary masks (lane axis == flattened h*W + w pixel index).
    pix = lax.broadcasted_iota(jnp.int32, (G, HW), 1)
    if (W & (W - 1)) == 0:
        w_idx = pix & (W - 1)
    else:
        w_idx = pix % W
    top_ok = pix >= W                # h - 1 >= 0      (needed when dy == 0)
    bot_ok = pix < (H - 1) * W       # h + 1 <= H - 1  (needed when dy == 2)
    left_ok = w_idx >= 1             # w - 1 >= 0      (needed when dx == 0)
    right_ok = w_idx <= W - 2        # w + 1 <= W - 1  (needed when dx == 2)

    # out[g, p] += t[t*G + g, p + s] for valid taps, s = (dy-1)*W + (dx-1).
    acc = jnp.zeros((G, HW), jnp.float32)
    for dy in range(3):
        for dx in range(3):
            t_idx = dy * 3 + dx
            s = (dy - 1) * W + (dx - 1)
            tap = t_ref[t_idx * G:(t_idx + 1) * G, :]   # sublane-aligned slice
            if s != 0:
                # circular lane shift (XLU): tap'[g, p] = tap[g, (p+s) % HW]
                tap = pltpu.roll(tap, shift=(-s) % HW, axis=1)
            conds = []
            if dy == 0:
                conds.append(top_ok)
            elif dy == 2:
                conds.append(bot_ok)
            if dx == 0:
                conds.append(left_ok)
            elif dx == 2:
                conds.append(right_ok)
            if conds:                                   # center tap: no mask
                m = conds[0]
                for c in conds[1:]:
                    m = jnp.logical_and(m, c)
                tap = jnp.where(m, tap, 0.0)
            acc = acc + tap

    # ---- fused torch.cat([x, out], 1): new features --------------------------
    o_ref[0, Cin:, :] = (acc + b2_ref[...]).astype(o_ref.dtype)


def dense_block_forward(x_nchw, params):
    """x_nchw: (N, Cin, H, W) float32. Returns (N, Cin + growth_rate, H, W)."""
    N, Cin, H, W = x_nchw.shape
    G = params["b2"].shape[0]
    HW = H * W
    Cout = Cin + G

    x_flat = x_nchw.reshape(N, Cin, HW)          # free reshape, no transpose

    out = pl.pallas_call(
        functools.partial(_dense_block_kernel, H, W),
        out_shape=jax.ShapeDtypeStruct((N, Cout, HW), jnp.float32),
        grid_spec=pltpu.PrefetchScalarGridSpec(
            num_scalar_prefetch=0,
            grid=(N,),
            in_specs=[
                pl.BlockSpec((1, Cin, HW), lambda n: (n, 0, 0)),   # x
                pl.BlockSpec((Cin, 1),     lambda n: (0, 0)),      # bn1 scale
                pl.BlockSpec((Cin, 1),     lambda n: (0, 0)),      # bn1 shift
                pl.BlockSpec((MID, Cin),   lambda n: (0, 0)),      # conv1 w (BN2 folded)
                pl.BlockSpec((MID, 1),     lambda n: (0, 0)),      # conv1 b (BN2 folded)
                pl.BlockSpec((9 * G, MID), lambda n: (0, 0)),      # conv2 fused weight
                pl.BlockSpec((G, 1),       lambda n: (0, 0)),      # conv2 bias
            ],
            out_specs=pl.BlockSpec((1, Cout, HW), lambda n: (n, 0, 0)),
            scratch_shapes=[pltpu.VMEM((9 * G, HW), jnp.float32)],
        ),
        compiler_params=pltpu.CompilerParams(
            dimension_semantics=("parallel",)),
    )(x_flat,
      params["bn1_scale"], params["bn1_shift"],
      params["w1f"], params["b1f"],
      params["w2f"], params["b2"])

    return out.reshape(N, Cout, H, W)            # free reshape


def make_params(key, input_channels, growth_rate):
    ks = jax.random.split(key, 8)

    # BatchNorm2d(input_channels) — eval-mode folded scale/shift
    g1 = 1.0 + 0.1 * jax.random.normal(ks[0], (input_channels,), jnp.float32)
    beta1 = 0.1 * jax.random.normal(ks[1], (input_channels,), jnp.float32)
    mean1 = 0.1 * jax.random.normal(ks[2], (input_channels,), jnp.float32)
    var1 = jnp.abs(jax.random.normal(ks[3], (input_channels,), jnp.float32)) + 0.5
    s1 = g1 / jnp.sqrt(var1 + EPS)
    t1 = beta1 - mean1 * s1

    # EWConv2d(input_channels, 128, kernel_size=1) — torch weight (128, Cin, 1, 1)
    w1_t = 0.1 * jax.random.normal(ks[4], (MID, input_channels, 1, 1), jnp.float32)
    b1 = 0.05 * jax.random.normal(ks[5], (MID,), jnp.float32)
    a1 = w1_t[:, :, 0, 0]                                    # (MID, Cin)

    # BatchNorm2d(128) — folded, then fused into conv1 (exact)
    g2 = jnp.full((MID,), 1.0, jnp.float32)
    beta2 = jnp.full((MID,), 0.02, jnp.float32)
    mean2 = jnp.full((MID,), 0.01, jnp.float32)
    var2 = jnp.full((MID,), 1.0, jnp.float32)
    s2 = g2 / jnp.sqrt(var2 + EPS)
    t2 = beta2 - mean2 * s2
    w1f = a1 * s2[:, None]                                   # (MID, Cin)
    b1f = b1 * s2 + t2                                       # (MID,)

    # EWConv2d(128, growth_rate, 3, padding=1) — torch weight (G, 128, 3, 3)
    w2_t = 0.05 * jax.random.normal(ks[6], (growth_rate, MID, 3, 3), jnp.float32)
    b2 = 0.05 * jax.random.normal(ks[7], (growth_rate,), jnp.float32)
    # tap-major fused weight: row (dy*3 + dx)*G + g, col c == w2_t[g, c, dy, dx]
    w2f = jnp.transpose(w2_t, (2, 3, 0, 1)).reshape(9 * growth_rate, MID)

    return {
        "bn1_scale": s1.reshape(input_channels, 1),
        "bn1_shift": t1.reshape(input_channels, 1),
        "w1f": w1f.astype(jnp.bfloat16),
        "b1f": b1f.reshape(MID, 1),
        "w2f": w2f.astype(jnp.bfloat16),
        "b2": b2.reshape(growth_rate, 1),
        "w2_torch": w2_t,          # unfused layout, used by the reference only
    }


def reference_forward(x_nchw, params):
    """Pure-JAX reference (same math & matmul precision, no Pallas)."""
    N, Cin, H, W = x_nchw.shape
    w2 = params["w2_torch"]                                  # (G, MID, 3, 3)
    G = w2.shape[0]
    x = jnp.transpose(x_nchw, (0, 2, 3, 1))                  # NHWC
    s1 = params["bn1_scale"].reshape(Cin)
    t1 = params["bn1_shift"].reshape(Cin)
    y = jnp.maximum(x * s1 + t1, 0.0)
    z = jnp.einsum("nhwc,mc->nhwm", y.astype(jnp.bfloat16), params["w1f"],
                   preferred_element_type=jnp.float32)
    z = jnp.maximum(z + params["b1f"].reshape(MID), 0.0).astype(jnp.bfloat16)
    zp = jnp.pad(z, ((0, 0), (1, 1), (1, 1), (0, 0)))
    out = jnp.zeros((N, H, W, G), jnp.float32) + params["b2"].reshape(G)
    for dy in range(3):
        for dx in range(3):
            out = out + jnp.einsum(
                "nhwc,gc->nhwg", zp[:, dy:dy + H, dx:dx + W, :],
                w2[:, :, dy, dx].astype(jnp.bfloat16),
                preferred_element_type=jnp.float32)
    out = jnp.transpose(out, (0, 3, 1, 2))
    return jnp.concatenate([x_nchw, out], axis=1)


if __name__ == "__main__":
    N, Cin, H, W = 2, 4, 16, 16
    growth_rate = 32

    key = jax.random.PRNGKey(0)
    kx, kp = jax.random.split(key)
    x = jax.random.normal(kx, (N, Cin, H, W), jnp.float32)
    params = make_params(kp, Cin, growth_rate)

    out = jax.block_until_ready(dense_block_forward(x, params))
    assert out.shape == (N, Cin + growth_rate, H, W), out.shape

    ref = jax.block_until_ready(reference_forward(x, params))
    assert jnp.allclose(out, ref, atol=1e-3, rtol=1e-3), \
        float(jnp.max(jnp.abs(out - ref)))

    print("KERNEL_OK")
</pallas_src>

<mosaic_0001>
module attributes {stable_mosaic.version = 11 : i64} {
  func.func @_dense_block_kernel(%arg0: i32, %arg1: memref<1x4x256xf32, #tpu.memory_space<vmem>>, %arg2: memref<4x1xf32, #tpu.memory_space<vmem>>, %arg3: memref<4x1xf32, #tpu.memory_space<vmem>>, %arg4: memref<128x4xbf16, #tpu.memory_space<vmem>>, %arg5: memref<128x1xf32, #tpu.memory_space<vmem>>, %arg6: memref<288x128xbf16, #tpu.memory_space<vmem>>, %arg7: memref<32x1xf32, #tpu.memory_space<vmem>>, %arg8: memref<1x36x256xf32, #tpu.memory_space<vmem>>, %arg9: memref<288x256xf32, #tpu.memory_space<vmem>>) attributes {dimension_semantics = [#tpu.dimension_semantics<parallel>], iteration_bounds = array<i64: 2>, scalar_prefetch = 0 : i64, scratch_operands = 1 : i64, tpu.core_type = #tpu.core_type<tc>, window_params = [{transform_indices = @transform_0, window_bounds = array<i64: 1, 4, 256>}, {pipeline_mode = #tpu.pipeline_mode<synchronous>, transform_indices = @transform_1, window_bounds = array<i64: 4, 1>}, {pipeline_mode = #tpu.pipeline_mode<synchronous>, transform_indices = @transform_2, window_bounds = array<i64: 4, 1>}, {pipeline_mode = #tpu.pipeline_mode<synchronous>, transform_indices = @transform_3, window_bounds = array<i64: 128, 4>}, {pipeline_mode = #tpu.pipeline_mode<synchronous>, transform_indices = @transform_4, window_bounds = array<i64: 128, 1>}, {pipeline_mode = #tpu.pipeline_mode<synchronous>, transform_indices = @transform_5, window_bounds = array<i64: 288, 128>}, {pipeline_mode = #tpu.pipeline_mode<synchronous>, transform_indices = @transform_6, window_bounds = array<i64: 32, 1>}, {transform_indices = @transform_7, window_bounds = array<i64: 1, 36, 256>}]} {
    %c0 = arith.constant 0 : index
    %c0_0 = arith.constant 0 : index
    %c0_1 = arith.constant 0 : index
    %0 = vector.load %arg1[%c0, %c0_0, %c0_1] : memref<1x4x256xf32, #tpu.memory_space<vmem>>, vector<1x4x256xf32>
    %1 = vector.shape_cast %0 : vector<1x4x256xf32> to vector<4x256xf32>
    %c0_2 = arith.constant 0 : index
    %c0_3 = arith.constant 0 : index
    %c0_4 = arith.constant 0 : index
    %2 = vector.load %arg8[%c0_2, %c0_3, %c0_4] : memref<1x36x256xf32, #tpu.memory_space<vmem>>, vector<1x4x256xf32>
    %3 = vector.shape_cast %2 : vector<1x4x256xf32> to vector<4x256xf32>
    %4 = vector.shape_cast %1 : vector<4x256xf32> to vector<1x4x256xf32>
    tpu.vector_store %arg8[%c0_2, %c0_3, %c0_4], %4 {strides = array<i32>} : memref<1x36x256xf32, #tpu.memory_space<vmem>>, vector<1x4x256xf32>,
    %c0_5 = arith.constant 0 : index
    %c0_6 = arith.constant 0 : index
    %5 = vector.load %arg2[%c0_5, %c0_6] : memref<4x1xf32, #tpu.memory_space<vmem>>, vector<4x1xf32>
    %6 = vector.broadcast %5 : vector<4x1xf32> to vector<4x256xf32>
    %7 = arith.mulf %1, %6 : vector<4x256xf32>
    %c0_7 = arith.constant 0 : index
    %c0_8 = arith.constant 0 : index
    %8 = vector.load %arg3[%c0_7, %c0_8] : memref<4x1xf32, #tpu.memory_space<vmem>>, vector<4x1xf32>
    %9 = vector.broadcast %8 : vector<4x1xf32> to vector<4x256xf32>
    %10 = arith.addf %7, %9 : vector<4x256xf32>
    %cst = arith.constant 0.000000e+00 : f32
    %11 = vector.broadcast %cst : f32 to vector<4x256xf32>
    %12 = arith.maximumf %10, %11 : vector<4x256xf32>
    %c0_9 = arith.constant 0 : index
    %c0_10 = arith.constant 0 : index
    %13 = vector.load %arg4[%c0_9, %c0_10] : memref<128x4xbf16, #tpu.memory_space<vmem>>, vector<128x4xbf16>
    %14 = arith.truncf %12 : vector<4x256xf32> to vector<4x256xbf16>
    %cst_11 = arith.constant dense<0.000000e+00> : vector<128x256xf32>
    %15 = tpu.matmul %13, %14, %cst_11 {dimension_numbers = #tpu.dot_dimension_numbers<[1], [0], [0], [1], [0, 0, 1, 1], [], []>} : vector<128x4xbf16>, vector<4x256xbf16>, vector<128x256xf32> -> vector<128x256xf32>
    %c0_12 = arith.constant 0 : index
    %c0_13 = arith.constant 0 : index
    %16 = vector.load %arg5[%c0_12, %c0_13] : memref<128x1xf32, #tpu.memory_space<vmem>>, vector<128x1xf32>
    %17 = vector.broadcast %16 : vector<128x1xf32> to vector<128x256xf32>
    %18 = arith.addf %15, %17 : vector<128x256xf32>
    %cst_14 = arith.constant 0.000000e+00 : f32
    %19 = vector.broadcast %cst_14 : f32 to vector<128x256xf32>
    %20 = arith.maximumf %18, %19 : vector<128x256xf32>
    %21 = arith.truncf %20 : vector<128x256xf32> to vector<128x256xbf16>
    %c0_15 = arith.constant 0 : index
    %c0_16 = arith.constant 0 : index
    %22 = vector.load %arg6[%c0_15, %c0_16] : memref<288x128xbf16, #tpu.memory_space<vmem>>, vector<288x128xbf16>
    %cst_17 = arith.constant dense<0.000000e+00> : vector<288x256xf32>
    %23 = tpu.matmul %22, %21, %cst_17 {dimension_numbers = #tpu.dot_dimension_numbers<[1], [0], [0], [1], [0, 0, 1, 1], [], []>} : vector<288x128xbf16>, vector<128x256xbf16>, vector<288x256xf32> -> vector<288x256xf32>
    %c0_18 = arith.constant 0 : index
    %c0_19 = arith.constant 0 : index
    %24 = vector.load %arg9[%c0_18, %c0_19] : memref<288x256xf32, #tpu.memory_space<vmem>>, vector<288x256xf32>
    tpu.vector_store %arg9[%c0_18, %c0_19], %23 {strides = array<i32>} : memref<288x256xf32, #tpu.memory_space<vmem>>, vector<288x256xf32>,
    %25 = tpu.iota {dimensions = array<i32: 1>} : vector<32x256xi32>
    %c15_i32 = arith.constant 15 : i32
    %26 = vector.broadcast %c15_i32 : i32 to vector<32x256xi32>
    %27 = arith.andi %25, %26 : vector<32x256xi32>
    %c16_i32 = arith.constant 16 : i32
    %28 = vector.broadcast %c16_i32 : i32 to vector<32x256xi32>
    %29 = arith.cmpi sge, %25, %28 : vector<32x256xi32>
    %c240_i32 = arith.constant 240 : i32
    %30 = vector.broadcast %c240_i32 : i32 to vector<32x256xi32>
    %31 = arith.cmpi slt, %25, %30 : vector<32x256xi32>
    %c1_i32 = arith.constant 1 : i32
    %32 = vector.broadcast %c1_i32 : i32 to vector<32x256xi32>
    %33 = arith.cmpi sge, %27, %32 : vector<32x256xi32>
    %c14_i32 = arith.constant 14 : i32
    %34 = vector.broadcast %c14_i32 : i32 to vector<32x256xi32>
    %35 = arith.cmpi sle, %27, %34 : vector<32x256xi32>
    %cst_20 = arith.constant 0.000000e+00 : f32
    %36 = vector.broadcast %cst_20 : f32 to vector<32x256xf32>
    %c0_21 = arith.constant 0 : index
    %c0_22 = arith.constant 0 : index
    %37 = vector.load %arg9[%c0_21, %c0_22] : memref<288x256xf32, #tpu.memory_space<vmem>>, vector<32x256xf32>
    %c17_i32 = arith.constant 17 : i32
    %38 = tpu.dynamic_rotate %37 by %c17_i32 dim 1 : vector<32x256xf32>, i32 -> vector<32x256xf32>
    %39 = arith.andi %29, %33 : vector<32x256xi1>
    %cst_23 = arith.constant 0.000000e+00 : f32
    %40 = vector.broadcast %cst_23 : f32 to vector<32x256xf32>
    %41 = arith.select %39, %38, %40 : vector<32x256xi1>, vector<32x256xf32>
    %42 = arith.addf %36, %41 : vector<32x256xf32>
    %c32 = arith.constant 32 : index
    %c0_24 = arith.constant 0 : index
    %43 = vector.load %arg9[%c32, %c0_24] : memref<288x256xf32, #tpu.memory_space<vmem>>, vector<32x256xf32>
    %c16_i32_25 = arith.constant 16 : i32
    %44 = tpu.dynamic_rotate %43 by %c16_i32_25 dim 1 : vector<32x256xf32>, i32 -> vector<32x256xf32>
    %cst_26 = arith.constant 0.000000e+00 : f32
    %45 = vector.broadcast %cst_26 : f32 to vector<32x256xf32>
    %46 = arith.select %29, %44, %45 : vector<32x256xi1>, vector<32x256xf32>
    %47 = arith.addf %42, %46 : vector<32x256xf32>
    %c64 = arith.constant 64 : index
    %c0_27 = arith.constant 0 : index
    %48 = vector.load %arg9[%c64, %c0_27] : memref<288x256xf32, #tpu.memory_space<vmem>>, vector<32x256xf32>
    %c15_i32_28 = arith.constant 15 : i32
    %49 = tpu.dynamic_rotate %48 by %c15_i32_28 dim 1 : vector<32x256xf32>, i32 -> vector<32x256xf32>
    %50 = arith.andi %29, %35 : vector<32x256xi1>
    %cst_29 = arith.constant 0.000000e+00 : f32
    %51 = vector.broadcast %cst_29 : f32 to vector<32x256xf32>
    %52 = arith.select %50, %49, %51 : vector<32x256xi1>, vector<32x256xf32>
    %53 = arith.addf %47, %52 : vector<32x256xf32>
    %c96 = arith.constant 96 : index
    %c0_30 = arith.constant 0 : index
    %54 = vector.load %arg9[%c96, %c0_30] : memref<288x256xf32, #tpu.memory_space<vmem>>, vector<32x256xf32>
    %c1_i32_31 = arith.constant 1 : i32
    %55 = tpu.dynamic_rotate %54 by %c1_i32_31 dim 1 : vector<32x256xf32>, i32 -> vector<32x256xf32>
    %cst_32 = arith.constant 0.000000e+00 : f32
    %56 = vector.broadcast %cst_32 : f32 to vector<32x256xf32>
    %57 = arith.select %33, %55, %56 : vector<32x256xi1>, vector<32x256xf32>
    %58 = arith.addf %53, %57 : vector<32x256xf32>
    %c128 = arith.constant 128 : index
    %c0_33 = arith.constant 0 : index
    %59 = vector.load %arg9[%c128, %c0_33] : memref<288x256xf32, #tpu.memory_space<vmem>>, vector<32x256xf32>
    %60 = arith.addf %58, %59 : vector<32x256xf32>
    %c160 = arith.constant 160 : index
    %c0_34 = arith.constant 0 : index
    %61 = vector.load %arg9[%c160, %c0_34] : memref<288x256xf32, #tpu.memory_space<vmem>>, vector<32x256xf32>
    %c255_i32 = arith.constant 255 : i32
    %62 = tpu.dynamic_rotate %61 by %c255_i32 dim 1 : vector<32x256xf32>, i32 -> vector<32x256xf32>
    %cst_35 = arith.constant 0.000000e+00 : f32
    %63 = vector.broadcast %cst_35 : f32 to vector<32x256xf32>
    %64 = arith.select %35, %62, %63 : vector<32x256xi1>, vector<32x256xf32>
    %65 = arith.addf %60, %64 : vector<32x256xf32>
    %c192 = arith.constant 192 : index
    %c0_36 = arith.constant 0 : index
    %66 = vector.load %arg9[%c192, %c0_36] : memref<288x256xf32, #tpu.memory_space<vmem>>, vector<32x256xf32>
    %c241_i32 = arith.constant 241 : i32
    %67 = tpu.dynamic_rotate %66 by %c241_i32 dim 1 : vector<32x256xf32>, i32 -> vector<32x256xf32>
    %68 = arith.andi %31, %33 : vector<32x256xi1>
    %cst_37 = arith.constant 0.000000e+00 : f32
    %69 = vector.broadcast %cst_37 : f32 to vector<32x256xf32>
    %70 = arith.select %68, %67, %69 : vector<32x256xi1>, vector<32x256xf32>
    %71 = arith.addf %65, %70 : vector<32x256xf32>
    %c224 = arith.constant 224 : index
    %c0_38 = arith.constant 0 : index
    %72 = vector.load %arg9[%c224, %c0_38] : memref<288x256xf32, #tpu.memory_space<vmem>>, vector<32x256xf32>
    %c240_i32_39 = arith.constant 240 : i32
    %73 = tpu.dynamic_rotate %72 by %c240_i32_39 dim 1 : vector<32x256xf32>, i32 -> vector<32x256xf32>
    %cst_40 = arith.constant 0.000000e+00 : f32
    %74 = vector.broadcast %cst_40 : f32 to vector<32x256xf32>
    %75 = arith.select %31, %73, %74 : vector<32x256xi1>, vector<32x256xf32>
    %76 = arith.addf %71, %75 : vector<32x256xf32>
    %c256 = arith.constant 256 : index
    %c0_41 = arith.constant 0 : index
    %77 = vector.load %arg9[%c256, %c0_41] : memref<288x256xf32, #tpu.memory_space<vmem>>, vector<32x256xf32>
    %c239_i32 = arith.constant 239 : i32
    %78 = tpu.dynamic_rotate %77 by %c239_i32 dim 1 : vector<32x256xf32>, i32 -> vector<32x256xf32>
    %79 = arith.andi %31, %35 : vector<32x256xi1>
    %cst_42 = arith.constant 0.000000e+00 : f32
    %80 = vector.broadcast %cst_42 : f32 to vector<32x256xf32>
    %81 = arith.select %79, %78, %80 : vector<32x256xi1>, vector<32x256xf32>
    %82 = arith.addf %76, %81 : vector<32x256xf32>
    %c0_43 = arith.constant 0 : index
    %c0_44 = arith.constant 0 : index
    %83 = vector.load %arg7[%c0_43, %c0_44] : memref<32x1xf32, #tpu.memory_space<vmem>>, vector<32x1xf32>
    %84 = vector.broadcast %83 : vector<32x1xf32> to vector<32x256xf32>
    %85 = arith.addf %82, %84 : vector<32x256xf32>
    %c0_45 = arith.constant 0 : index
    %c4 = arith.constant 4 : index
    %c0_46 = arith.constant 0 : index
    %86 = vector.load %arg8[%c0_45, %c4, %c0_46] : memref<1x36x256xf32, #tpu.memory_space<vmem>>, vector<1x32x256xf32>
    %87 = vector.shape_cast %86 : vector<1x32x256xf32> to vector<32x256xf32>
    %88 = vector.shape_cast %85 : vector<32x256xf32> to vector<1x32x256xf32>
    tpu.vector_store %arg8[%c0_45, %c4, %c0_46], %88 {strides = array<i32>} : memref<1x36x256xf32, #tpu.memory_space<vmem>>, vector<1x32x256xf32>,
    return
  }
  func.func @transform_0(%arg0: i32) -> (i32, i32, i32) {
    %c0_i32 = arith.constant 0 : i32
    %c0_i32_0 = arith.constant 0 : i32
    %c0_i32_1 = arith.constant 0 : i32
    return %arg0, %c0_i32, %c0_i32_0 : i32, i32, i32
  }
  func.func @transform_1(%arg0: i32) -> (i32, i32) {
    %c0_i32 = arith.constant 0 : i32
    %c0_i32_0 = arith.constant 0 : i32
    %c0_i32_1 = arith.constant 0 : i32
    return %c0_i32, %c0_i32_0 : i32, i32
  }
  func.func @transform_2(%arg0: i32) -> (i32, i32) {
    %c0_i32 = arith.constant 0 : i32
    %c0_i32_0 = arith.constant 0 : i32
    %c0_i32_1 = arith.constant 0 : i32
    return %c0_i32, %c0_i32_0 : i32, i32
  }
  func.func @transform_3(%arg0: i32) -> (i32, i32) {
    %c0_i32 = arith.constant 0 : i32
    %c0_i32_0 = arith.constant 0 : i32
    %c0_i32_1 = arith.constant 0 : i32
    return %c0_i32, %c0_i32_0 : i32, i32
  }
  func.func @transform_4(%arg0: i32) -> (i32, i32) {
    %c0_i32 = arith.constant 0 : i32
    %c0_i32_0 = arith.constant 0 : i32
    %c0_i32_1 = arith.constant 0 : i32
    return %c0_i32, %c0_i32_0 : i32, i32
  }
  func.func @transform_5(%arg0: i32) -> (i32, i32) {
    %c0_i32 = arith.constant 0 : i32
    %c0_i32_0 = arith.constant 0 : i32
    %c0_i32_1 = arith.constant 0 : i32
    return %c0_i32, %c0_i32_0 : i32, i32
  }
  func.func @transform_6(%arg0: i32) -> (i32, i32) {
    %c0_i32 = arith.constant 0 : i32
    %c0_i32_0 = arith.constant 0 : i32
    %c0_i32_1 = arith.constant 0 : i32
    return %c0_i32, %c0_i32_0 : i32, i32
  }
  func.func @transform_7(%arg0: i32) -> (i32, i32, i32) {
    %c0_i32 = arith.constant 0 : i32
    %c0_i32_0 = arith.constant 0 : i32
    %c0_i32_1 = arith.constant 0 : i32
    return %arg0, %c0_i32, %c0_i32_0 : i32, i32, i32
  }
}

</mosaic_0001>

<llo_original>
// kernel: tpu_custom_call.1
$region0: #{tpu_custom_call.1}
  #allocation0 [shape = 'u32[]', space=smem, size = 0x4, offset = 0x4, fixed_abs, tag = 'smem constant byte address 0x4 - core index']
  #allocation1 [shape = 'u32[144,128]{1,0:T(1,128)}', space=vmem, size = 0x12000, scoped, tag = 'internal scratch']
  #allocation2 [shape = 'f32[288,256]{1,0:T(8,128)}', space=vmem, size = 0x48000, scoped, tag = 'scratch operand']
  %s0 = inlined_call_operand.vmem [shape: f32[2,4,256], index: 0, kind: input, shape index: {}]
  %s1 = inlined_call_operand.vmem [shape: f32[4,1], index: 1, kind: input, shape index: {}]
  %s2 = inlined_call_operand.vmem [shape: f32[4,1], index: 2, kind: input, shape index: {}]
  %s3 = inlined_call_operand.vmem [shape: bf16[128,4], index: 3, kind: input, shape index: {}]
  %s4 = inlined_call_operand.vmem [shape: f32[128,1], index: 4, kind: input, shape index: {}]
  %s5 = inlined_call_operand.vmem [shape: bf16[288,128], index: 5, kind: input, shape index: {}]
  %s6 = inlined_call_operand.vmem [shape: f32[32,1], index: 6, kind: input, shape index: {}]
  %s7 = inlined_call_operand.vmem [shape: f32[2,36,256], index: 7, kind: output, shape index: {}]
  %s8 = sld [smem:[#allocation0]]
  $region61: #{tpu_custom_call.1} parent=0
    _
  %s10 = ssub.s32 1, %s8
  %s11 = scalar_select 0, %s10, %s8
  loop: start=0, step=1, limit=4
  $region2: #{tpu_custom_call.1} parent=0 // loop_pre_header
    _
  $region3: #{tpu_custom_call.1} parent=0 // loop_header
    %s13 = sphi 0, %s17
    %p14 = scmp.ge.s32.totalorder %s13, 4
    %s23 = sphi 0, %s25
    %s26 = sphi 0, %s23
    %s27 = sphi 0, %s26
    %s43 = sphi 0, %s27
    %s47 = sphi 0, %s47
    %s49 = sphi 0, %s47
    %s50 = sphi 0, %s49
    %s64 = sphi 0, %s50
    %s68 = sphi 0, %s68
    %s70 = sphi 0, %s68
    %s71 = sphi 0, %s70
    %s85 = sphi 0, %s71
    %s89 = sphi 0, %s89
    %s91 = sphi 0, %s89
    %s92 = sphi 0, %s91
    %s106 = sphi 0, %s92
    %s110 = sphi 0, %s110
    %s112 = sphi 0, %s110
    %s113 = sphi 0, %s112
    %s127 = sphi 0, %s113
    %s131 = sphi 0, %s131
    %s133 = sphi 0, %s131
    %s134 = sphi 0, %s133
    %s148 = sphi 0, %s134
    %s152 = sphi 0, %s152
    %s154 = sphi 0, %s152
    %s155 = sphi 0, %s154
    %s169 = sphi 0, %s155
    %s175 = sphi 0, %s177
    %s178 = sphi 0, %s175
    %s179 = sphi 0, %s178
    %s195 = sphi 0, %s179
  $region4: #{tpu_custom_call.1} parent=0 // loop_header_branch
    %16 = sbr.rel (%p14) target = $region8
  $region5: #{tpu_custom_call.1} parent=0 // loop_body
    %s18 = ssub.s32 %s13, 1
    %s19 = ssub.s32 %s13, 2
    %s20 = sadd.s32 %s13, 1
    %s21 = ssub.s32 %s13, %s20
    %p22 = scmp.eq.s32.totalorder %s21, 0
    %s24 = sadd.s32 %s23, 1
    %s25 = scalar_select %p22, %s23, %s24
    %p28 = pneg %p22
    %p29 = scmp.eq.s32.totalorder %s13, 1
    %p30 = por %p28, %p29
    %p31 = scmp.ne.s32.totalorder %s23, %s26
    %p32 = scmp.eq.s32.totalorder %s13, 0
    %p33 = por %p31, %p32
    %p34 = scmp.ne.s32.totalorder %s23, %s26
    %p35 = scmp.eq.s32.totalorder %s18, 1
    %p36 = por %p34, %p35
    %p37 = scmp.ne.s32.totalorder %s26, %s27
    %p38 = scmp.eq.s32.totalorder %s18, 0
    %p39 = por %p37, %p38
    %p40 = scmp.ne.s32.totalorder %s26, %s27
    %p41 = scmp.eq.s32.totalorder %s19, 1
    %p42 = por %p40, %p41
    %p44 = scmp.ne.s32.totalorder %s27, %s43
    %p45 = scmp.eq.s32.totalorder %s19, 0
    %p46 = por %p44, %p45
    %s48 = sadd.s32 %s47, 1
    %p51 = scmp.eq.s32.totalorder %s13, 1
    %p52 = scmp.ne.s32.totalorder %s47, %s49
    %p53 = scmp.eq.s32.totalorder %s13, 0
    %p54 = por %p52, %p53
    %p55 = scmp.ne.s32.totalorder %s47, %s49
    %p56 = scmp.eq.s32.totalorder %s18, 1
    %p57 = por %p55, %p56
    %p58 = scmp.ne.s32.totalorder %s49, %s50
    %p59 = scmp.eq.s32.totalorder %s18, 0
    %p60 = por %p58, %p59
    %p61 = scmp.ne.s32.totalorder %s49, %s50
    %p62 = scmp.eq.s32.totalorder %s19, 1
    %p63 = por %p61, %p62
    %p65 = scmp.ne.s32.totalorder %s50, %s64
    %p66 = scmp.eq.s32.totalorder %s19, 0
    %p67 = por %p65, %p66
    %s69 = sadd.s32 %s68, 1
    %p72 = scmp.eq.s32.totalorder %s13, 1
    %p73 = scmp.ne.s32.totalorder %s68, %s70
    %p74 = scmp.eq.s32.totalorder %s13, 0
    %p75 = por %p73, %p74
    %p76 = scmp.ne.s32.totalorder %s68, %s70
    %p77 = scmp.eq.s32.totalorder %s18, 1
    %p78 = por %p76, %p77
    %p79 = scmp.ne.s32.totalorder %s70, %s71
    %p80 = scmp.eq.s32.totalorder %s18, 0
    %p81 = por %p79, %p80
    %p82 = scmp.ne.s32.totalorder %s70, %s71
    %p83 = scmp.eq.s32.totalorder %s19, 1
    %p84 = por %p82, %p83
    %p86 = scmp.ne.s32.totalorder %s71, %s85
    %p87 = scmp.eq.s32.totalorder %s19, 0
    %p88 = por %p86, %p87
    %s90 = sadd.s32 %s89, 1
    %p93 = scmp.eq.s32.totalorder %s13, 1
    %p94 = scmp.ne.s32.totalorder %s89, %s91
    %p95 = scmp.eq.s32.totalorder %s13, 0
    %p96 = por %p94, %p95
    %p97 = scmp.ne.s32.totalorder %s89, %s91
    %p98 = scmp.eq.s32.totalorder %s18, 1
    %p99 = por %p97, %p98
    %p100 = scmp.ne.s32.totalorder %s91, %s92
    %p101 = scmp.eq.s32.totalorder %s18, 0
    %p102 = por %p100, %p101
    %p103 = scmp.ne.s32.totalorder %s91, %s92
    %p104 = scmp.eq.s32.totalorder %s19, 1
    %p105 = por %p103, %p104
    %p107 = scmp.ne.s32.totalorder %s92, %s106
    %p108 = scmp.eq.s32.totalorder %s19, 0
    %p109 = por %p107, %p108
    %s111 = sadd.s32 %s110, 1
    %p114 = scmp.eq.s32.totalorder %s13, 1
    %p115 = scmp.ne.s32.totalorder %s110, %s112
    %p116 = scmp.eq.s32.totalorder %s13, 0
    %p117 = por %p115, %p116
    %p118 = scmp.ne.s32.totalorder %s110, %s112
    %p119 = scmp.eq.s32.totalorder %s18, 1
    %p120 = por %p118, %p119
    %p121 = scmp.ne.s32.totalorder %s112, %s113
    %p122 = scmp.eq.s32.totalorder %s18, 0
    %p123 = por %p121, %p122
    %p124 = scmp.ne.s32.totalorder %s112, %s113
    %p125 = scmp.eq.s32.totalorder %s19, 1
    %p126 = por %p124, %p125
    %p128 = scmp.ne.s32.totalorder %s113, %s127
    %p129 = scmp.eq.s32.totalorder %s19, 0
    %p130 = por %p128, %p129
    %s132 = sadd.s32 %s131, 1
    %p135 = scmp.eq.s32.totalorder %s13, 1
    %p136 = scmp.ne.s32.totalorder %s131, %s133
    %p137 = scmp.eq.s32.totalorder %s13, 0
    %p138 = por %p136, %p137
    %p139 = scmp.ne.s32.totalorder %s131, %s133
    %p140 = scmp.eq.s32.totalorder %s18, 1
    %p141 = por %p139, %p140
    %p142 = scmp.ne.s32.totalorder %s133, %s134
    %p143 = scmp.eq.s32.totalorder %s18, 0
    %p144 = por %p142, %p143
    %p145 = scmp.ne.s32.totalorder %s133, %s134
    %p146 = scmp.eq.s32.totalorder %s19, 1
    %p147 = por %p145, %p146
    %p149 = scmp.ne.s32.totalorder %s134, %s148
    %p150 = scmp.eq.s32.totalorder %s19, 0
    %p151 = por %p149, %p150
    %s153 = sadd.s32 %s152, 1
    %p156 = scmp.eq.s32.totalorder %s13, 1
    %p157 = scmp.ne.s32.totalorder %s152, %s154
    %p158 = scmp.eq.s32.totalorder %s13, 0
    %p159 = por %p157, %p158
    %p160 = scmp.ne.s32.totalorder %s152, %s154
    %p161 = scmp.eq.s32.totalorder %s18, 1
    %p162 = por %p160, %p161
    %p163 = scmp.ne.s32.totalorder %s154, %s155
    %p164 = scmp.eq.s32.totalorder %s18, 0
    %p165 = por %p163, %p164
    %p166 = scmp.ne.s32.totalorder %s154, %s155
    %p167 = scmp.eq.s32.totalorder %s19, 1
    %p168 = por %p166, %p167
    %p170 = scmp.ne.s32.totalorder %s155, %s169
    %p171 = scmp.eq.s32.totalorder %s19, 0
    %p172 = por %p170, %p171
    %s173 = ssub.s32 %s13, %s20
    %p174 = scmp.eq.s32.totalorder %s173, 0
    %s176 = sadd.s32 %s175, 1
    %s177 = scalar_select %p174, %s175, %s176
    %p180 = pneg %p174
    %p181 = scmp.eq.s32.totalorder %s13, 1
    %p182 = por %p180, %p181
    %p183 = scmp.ne.s32.totalorder %s175, %s178
    %p184 = scmp.eq.s32.totalorder %s13, 0
    %p185 = por %p183, %p184
    %p186 = scmp.ne.s32.totalorder %s175, %s178
    %p187 = scmp.eq.s32.totalorder %s18, 1
    %p188 = por %p186, %p187
    %p189 = scmp.ne.s32.totalorder %s178, %s179
    %p190 = scmp.eq.s32.totalorder %s18, 0
    %p191 = por %p189, %p190
    %p192 = scmp.ne.s32.totalorder %s178, %s179
    %p193 = scmp.eq.s32.totalorder %s19, 1
    %p194 = por %p192, %p193
    %p196 = scmp.ne.s32.totalorder %s179, %s195
    %p197 = scmp.eq.s32.totalorder %s19, 0
    %p198 = por %p196, %p197
    %p199 = scmp.le.s32.totalorder 1, %s13
    %p200 = scmp.lt.s32.totalorder %s13, 3
    %p201 = pnand %p199, %p200
    %p202 = pneg %p201
    // Predicated region
    $region9: #{tpu_custom_call.1} parent=5 // pred_check
      _
    $region10: #{tpu_custom_call.1} parent=5 // pred_check_branch
      %204 = sbr.rel (%p201) target = $region12
    $region11: #{tpu_custom_call.1} parent=5 // pred_region
      %s205 = ssub.s32 %s13, 1
      // Predicated region
      $region13: #{tpu_custom_call.1} parent=11 // pred_check
        %p206 = pneg %p60
      $region14: #{tpu_custom_call.1} parent=11 // pred_check_branch
        %208 = sbr.rel (%p206) target = $region16
      $region15: #{tpu_custom_call.1} parent=11 // pred_region
        _
      $region16: #{tpu_custom_call.1} parent=11 // pred_fallthru
        _
      // Predicated region
      $region17: #{tpu_custom_call.1} parent=11 // pred_check
        %p209 = pneg %p81
      $region18: #{tpu_custom_call.1} parent=11 // pred_check_branch
        %211 = sbr.rel (%p209) target = $region20
      $region19: #{tpu_custom_call.1} parent=11 // pred_region
        _
      $region20: #{tpu_custom_call.1} parent=11 // pred_fallthru
        _
      // Predicated region
      $region21: #{tpu_custom_call.1} parent=11 // pred_check
        %p212 = pneg %p102
      $region22: #{tpu_custom_call.1} parent=11 // pred_check_branch
        %214 = sbr.rel (%p212) target = $region24
      $region23: #{tpu_custom_call.1} parent=11 // pred_region
        _
      $region24: #{tpu_custom_call.1} parent=11 // pred_fallthru
        _
      // Predicated region
      $region25: #{tpu_custom_call.1} parent=11 // pred_check
        %p215 = pneg %p123
      $region26: #{tpu_custom_call.1} parent=11 // pred_check_branch
        %217 = sbr.rel (%p215) target = $region28
      $region27: #{tpu_custom_call.1} parent=11 // pred_region
        _
      $region28: #{tpu_custom_call.1} parent=11 // pred_fallthru
        _
      // Predicated region
      $region29: #{tpu_custom_call.1} parent=11 // pred_check
        %p218 = pneg %p144
      $region30: #{tpu_custom_call.1} parent=11 // pred_check_branch
        %220 = sbr.rel (%p218) target = $region32
      $region31: #{tpu_custom_call.1} parent=11 // pred_region
        _
      $region32: #{tpu_custom_call.1} parent=11 // pred_fallthru
        _
      // Predicated region
      $region33: #{tpu_custom_call.1} parent=11 // pred_check
        %p221 = pneg %p165
      $region34: #{tpu_custom_call.1} parent=11 // pred_check_branch
        %223 = sbr.rel (%p221) target = $region36
      $region35: #{tpu_custom_call.1} parent=11 // pred_region
        _
      $region36: #{tpu_custom_call.1} parent=11 // pred_fallthru
        _
    $region12: #{tpu_custom_call.1} parent=5 // pred_fallthru
      _
    %p224 = scmp.lt.s32.totalorder %s13, 2
    // Predicated region
    $region37: #{tpu_custom_call.1} parent=5 // pred_check
      %p225 = pneg %p224
    $region38: #{tpu_custom_call.1} parent=5 // pred_check_branch
      %227 = sbr.rel (%p225) target = $region40
    $region39: #{tpu_custom_call.1} parent=5 // pred_region
      // Predicated region
      $region41: #{tpu_custom_call.1} parent=39 // pred_check
        %p228 = pneg %p33
      $region42: #{tpu_custom_call.1} parent=39 // pred_check_branch
        %230 = sbr.rel (%p228) target = $region44
      $region43: #{tpu_custom_call.1} parent=39 // pred_region
        %p231 = scmp.lt.s32.totalorder %s13, 1
        %s232 = scalar_select %p231, %s13, 1
        %s233 = smul.addr %s232, 2
        %s234 = smul.addr %s233, 4
        %s235 = scalar_lea.vmem %s0, %s234
      $region44: #{tpu_custom_call.1} parent=39 // pred_fallthru
        _
    $region40: #{tpu_custom_call.1} parent=5 // pred_fallthru
      _
    %p236 = scmp.le.s32.totalorder 1, %s13
    %p237 = scmp.lt.s32.totalorder %s13, 3
    %p238 = pnand %p236, %p237
    %p239 = pneg %p238
    // Predicated region
    $region45: #{tpu_custom_call.1} parent=5 // pred_check
      _
    $region46: #{tpu_custom_call.1} parent=5 // pred_check_branch
      %241 = sbr.rel (%p238) target = $region48
    $region47: #{tpu_custom_call.1} parent=5 // pred_region
      %s242 = ssub.s32 %s13, 1
      %p243 = scmp.lt.s32.totalorder %s18, 1
      %s244 = scalar_select %p243, %s18, 1
      %s245 = smul.addr %s244, 2
      %s246 = smul.addr %s245, 4
      %s247 = scalar_lea.vmem %s0, %s246
      %p248 = pneg %p39
      %p249 = pneg %p36
      %p250 = pneg %p60
      %p251 = pneg %p57
      %p252 = pneg %p81
      %p253 = pneg %p78
      %p254 = pneg %p102
      %p255 = pneg %p99
      %p256 = pneg %p123
      %p257 = pneg %p120
      %p258 = pneg %p144
      %p259 = pneg %p141
      %p260 = pneg %p165
      %p261 = pneg %p162
      %p262 = pneg %p191
      %p263 = pneg %p188
      %p264 = scmp.lt.s32.totalorder %s18, 1
      %s265 = scalar_select %p264, %s18, 1
      %s266 = smul.addr %s265, 10
      %s267 = smul.addr %s266, 8
      %s268 = scalar_lea.vmem %s7, %s267
      %p269 = scmp.lt.s32.totalorder %s18, 1
      %s270 = scalar_select %p269, %s18, 1
      %s271 = smul.addr %s270, 2
      %s272 = smul.addr %s271, 4
      %s273 = scalar_lea.vmem %s0, %s272
      %p274 = scmp.lt.s32.totalorder %s18, 1
      %s275 = scalar_select %p274, %s18, 1
      %s276 = smul.addr %s275, 10
      %s277 = smul.addr %s276, 8
      %s278 = scalar_lea.vmem %s7, %s277
      %v280 = vld [vmem:[%s273] sm:$0xff]
      %v282 = vcombine.high %v280, %v280
      %284 = vst [vmem:[%s278] sm:$0xf] %v280
      %285 = vst [vmem:[%s278 + $0x8] sm:$0xf] %v282
      %v286 = vld [vmem:[%s1] sm:$0xf]
      %288 = vset.pattern.permute.xlu0 0
      %289 = vperm.xlu0 %288, %v286
      %v290 = vpop.permute.xlu0 %289
      %v292 = vunpack.c.l.s4 839922192
      %v293 = vunpack.c.0.s8 %v292
      %v294 = vlaneseq
      %v295 = vshrl.u32 %v294, 7
      %v296 = vsub.s32 %v293, %v295
      %v297 = vrot.slane %v290, %v296
      %v299 = vmul.f32 %v280, %v297
      %v300 = vld [vmem:[%s2] sm:$0xf]
      %302 = vset.pattern.permute.xlu0 0
      %303 = vperm.xlu0 %302, %v300
      %v304 = vpop.permute.xlu0 %303
      %v306 = vunpack.c.l.s4 839922192
      %v307 = vunpack.c.0.s8 %v306
      %v308 = vlaneseq
      %v309 = vshrl.u32 %v308, 7
      %v310 = vsub.s32 %v307, %v309
      %v311 = vrot.slane %v304, %v310
      %v313 = vadd.f32 %v299, %v311
      %v314 = vmax.f32 %v313, 0.0
      %v315 = vld [vmem:[%s3] sm:$0xf]
      %v316 = vld [vmem:[%s3 + $0x4] sm:$0xf]
      %v317 = vld [vmem:[%s3 + $0x8] sm:$0xf]
      %v318 = vld [vmem:[%s3 + $0xc] sm:$0xf]
      %v319 = vld [vmem:[%s3 + $0x10] sm:$0xf]
      %v320 = vld [vmem:[%s3 + $0x14] sm:$0xf]
      %v321 = vld [vmem:[%s3 + $0x18] sm:$0xf]
      %v322 = vld [vmem:[%s3 + $0x1c] sm:$0xf]
      %v323 = vld [vmem:[%s3 + $0x20] sm:$0xf]
      %v324 = vld [vmem:[%s3 + $0x24] sm:$0xf]
      %v325 = vld [vmem:[%s3 + $0x28] sm:$0xf]
      %v326 = vld [vmem:[%s3 + $0x2c] sm:$0xf]
      %v327 = vld [vmem:[%s3 + $0x30] sm:$0xf]
      %v328 = vld [vmem:[%s3 + $0x34] sm:$0xf]
      %v329 = vld [vmem:[%s3 + $0x38] sm:$0xf]
      %v330 = vld [vmem:[%s3 + $0x3c] sm:$0xf]
      %v332 = vcombine.high %v314, %v314
      %v334 = vpack.c.bf16 %v314, %v314
      %v335 = vpack.c.bf16 %v332, %v332
      %v336 = vld [vmem:[%s4] sm:$0xff]
      %v337 = vld [vmem:[%s4 + $0x8] sm:$0xff]
      %v338 = vld [vmem:[%s4 + $0x10] sm:$0xff]
      %v339 = vld [vmem:[%s4 + $0x18] sm:$0xff]
      %v340 = vld [vmem:[%s4 + $0x20] sm:$0xff]
      %v341 = vld [vmem:[%s4 + $0x28] sm:$0xff]
      %v342 = vld [vmem:[%s4 + $0x30] sm:$0xff]
      %v343 = vld [vmem:[%s4 + $0x38] sm:$0xff]
      %v344 = vld [vmem:[%s4 + $0x40] sm:$0xff]
      %v345 = vld [vmem:[%s4 + $0x48] sm:$0xff]
      %v346 = vld [vmem:[%s4 + $0x50] sm:$0xff]
      %v347 = vld [vmem:[%s4 + $0x58] sm:$0xff]
      %v348 = vld [vmem:[%s4 + $0x60] sm:$0xff]
      %v349 = vld [vmem:[%s4 + $0x68] sm:$0xff]
      %v350 = vld [vmem:[%s4 + $0x70] sm:$0xff]
      %v351 = vld [vmem:[%s4 + $0x78] sm:$0xff]
      %353 = vset.pattern.permute.xlu0 0
      %354 = vperm.xlu0 %353, %v336
      %v355 = vpop.permute.xlu0 %354
      %358 = vset.pattern.permute.xlu0 0
      %359 = vperm.xlu0 %358, %v337
      %v360 = vpop.permute.xlu0 %359
      %363 = vset.pattern.permute.xlu0 0
      %364 = vperm.xlu0 %363, %v338
      %v365 = vpop.permute.xlu0 %364
      %368 = vset.pattern.permute.xlu0 0
      %369 = vperm.xlu0 %368, %v339
      %v370 = vpop.permute.xlu0 %369
      %373 = vset.pattern.permute.xlu0 0
      %374 = vperm.xlu0 %373, %v340
      %v375 = vpop.permute.xlu0 %374
      %378 = vset.pattern.permute.xlu0 0
      %379 = vperm.xlu0 %378, %v341
      %v380 = vpop.permute.xlu0 %379
      %383 = vset.pattern.permute.xlu0 0
      %384 = vperm.xlu0 %383, %v342
      %v385 = vpop.permute.xlu0 %384
      %388 = vset.pattern.permute.xlu0 0
      %389 = vperm.xlu0 %388, %v343
      %v390 = vpop.permute.xlu0 %389
      %393 = vset.pattern.permute.xlu0 0
      %394 = vperm.xlu0 %393, %v344
      %v395 = vpop.permute.xlu0 %394
      %398 = vset.pattern.permute.xlu0 0
      %399 = vperm.xlu0 %398, %v345
      %v400 = vpop.permute.xlu0 %399
      %403 = vset.pattern.permute.xlu0 0
      %404 = vperm.xlu0 %403, %v346
      %v405 = vpop.permute.xlu0 %404
      %408 = vset.pattern.permute.xlu0 0
      %409 = vperm.xlu0 %408, %v347
      %v410 = vpop.permute.xlu0 %409
      %413 = vset.pattern.permute.xlu0 0
      %414 = vperm.xlu0 %413, %v348
      %v415 = vpop.permute.xlu0 %414
      %418 = vset.pattern.permute.xlu0 0
      %419 = vperm.xlu0 %418, %v349
      %v420 = vpop.permute.xlu0 %419
      %423 = vset.pattern.permute.xlu0 0
      %424 = vperm.xlu0 %423, %v350
      %v425 = vpop.permute.xlu0 %424
      %428 = vset.pattern.permute.xlu0 0
      %429 = vperm.xlu0 %428, %v351
      %v430 = vpop.permute.xlu0 %429
      %v448 = vunpack.c.l.b16 %v315
      %v449 = vunpack.c.l.b16 %v316
      %v450 = vunpack.c.l.b16 %v317
      %v451 = vunpack.c.l.b16 %v318
      %v452 = vunpack.c.l.b16 %v319
      %v453 = vunpack.c.l.b16 %v320
      %v454 = vunpack.c.l.b16 %v321
      %v455 = vunpack.c.l.b16 %v322
      %v456 = vunpack.c.l.b16 %v323
      %v457 = vunpack.c.l.b16 %v324
      %v458 = vunpack.c.l.b16 %v325
      %v459 = vunpack.c.l.b16 %v326
      %v460 = vunpack.c.l.b16 %v327
      %v461 = vunpack.c.l.b16 %v328
      %v462 = vunpack.c.l.b16 %v329
      %v463 = vunpack.c.l.b16 %v330
      %v464 = vpack.c.b16 %v449, %v448
      %v465 = vpack.c.b16 %v451, %v450
      %v466 = vpack.c.b16 %v453, %v452
      %v467 = vpack.c.b16 %v455, %v454
      %v468 = vpack.c.b16 %v457, %v456
      %v469 = vpack.c.b16 %v459, %v458
      %v470 = vpack.c.b16 %v461, %v460
      %v471 = vpack.c.b16 %v463, %v462
      %vm472 = vcmask 31744
      %v474 = vsel %vm472, %v464, 0
      %v477 = vsel %vm472, %v465, 0
      %v480 = vsel %vm472, %v466, 0
      %v483 = vsel %vm472, %v467, 0
      %v486 = vsel %vm472, %v468, 0
      %v489 = vsel %vm472, %v469, 0
      %v492 = vsel %vm472, %v470, 0
      %v495 = vsel %vm472, %v471, 0
      %vm497 = vcmask 1041408
      %v499 = vsel %vm497, %v334, 0
      %v502 = vsel %vm497, %v335, 0
      %504 = vmatprep.subr.bf16.mxu0 0
      %505 = vmatpush1.bf16.msra.mxu0 0
      %506 = vmatprep.subr.bf16.mxu0 0
      %507 = vmatpush1.bf16.msra.mxu0 0
      %508 = vmatprep.subr.bf16.mxu0 0
      %509 = vmatpush1.bf16.msra.mxu0 0
      %510 = vmatprep.subr.bf16.mxu0 0
      %511 = vmatpush1.bf16.msra.mxu0 0
      %512 = vmatprep.subr.bf16.mxu0 0
      %513 = vmatpush1.bf16.msra.mxu0 0
      %514 = vmatprep.subr.bf16.mxu0 0
      %515 = vmatpush1.bf16.msra.mxu0 0
      %516 = vmatprep.subr.bf16.mxu0 0
      %517 = vmatpush1.bf16.msra.mxu0 0
      %518 = vmatprep.subr.bf16.mxu0 %v502
      %519 = vmatpush1.bf16.msra.mxu0 %v499
      %520 = vmatprep.subr.bf16.mxu0 0
      %521 = vmatpush2.bf16.msra.mxu0 0
      %522 = vmatprep.subr.bf16.mxu0 0
      %523 = vmatpush2.bf16.msra.mxu0 0
      %524 = vmatprep.subr.bf16.mxu0 0
      %525 = vmatpush2.bf16.msra.mxu0 0
      %526 = vmatprep.subr.bf16.mxu0 0
      %527 = vmatpush2.bf16.msra.mxu0 0
      %528 = vmatprep.subr.bf16.mxu0 0
      %529 = vmatpush2.bf16.msra.mxu0 0
      %530 = vmatprep.subr.bf16.mxu0 0
      %531 = vmatpush2.bf16.msra.mxu0 0
      %532 = vmatprep.subr.bf16.mxu0 0
      %533 = vmatpush2.bf16.msra.mxu0 0
      %534 = vmatprep.subr.bf16.mxu0 0
      %535 = vmatpush2.bf16.msra.mxu0 0
      %536 = vmatprep.mubr.bf16.mxu0 0
      %537 = vmatmul.mubr.bf16.gmra.mxu0 %v474
      %v538 = vpop.f32.mrf.mxu0
      %v539 = vadd.f32 %v355, %v538
      %v540 = vpop.f32.mrf.mxu0
      %v541 = vadd.f32 %v355, %v540
      %v542 = vpop.f32.mrf.mxu0
      %v543 = vadd.f32 %v360, %v542
      %v544 = vpop.f32.mrf.mxu0
      %v545 = vadd.f32 %v360, %v544
      %546 = vmatprep.mubr.bf16.mxu0 0
      %547 = vmatmul.mubr.bf16.gmra.mxu0 %v477
      %v548 = vpop.f32.mrf.mxu0
      %v549 = vadd.f32 %v365, %v548
      %v550 = vpop.f32.mrf.mxu0
      %v551 = vadd.f32 %v365, %v550
      %v552 = vpop.f32.mrf.mxu0
      %v553 = vadd.f32 %v370, %v552
      %v554 = vpop.f32.mrf.mxu0
      %v555 = vadd.f32 %v370, %v554
      %556 = vmatprep.mubr.bf16.mxu0 0
      %557 = vmatmul.mubr.bf16.gmra.mxu0 %v480
      %v558 = vpop.f32.mrf.mxu0
      %v559 = vadd.f32 %v375, %v558
      %v560 = vpop.f32.mrf.mxu0
      %v561 = vadd.f32 %v375, %v560
      %v562 = vpop.f32.mrf.mxu0
      %v563 = vadd.f32 %v380, %v562
      %v564 = vpop.f32.mrf.mxu0
      %v565 = vadd.f32 %v380, %v564
      %566 = vmatprep.mubr.bf16.mxu0 0
      %567 = vmatmul.mubr.bf16.gmra.mxu0 %v483
      %v568 = vpop.f32.mrf.mxu0
      %v569 = vadd.f32 %v385, %v568
      %v570 = vpop.f32.mrf.mxu0
      %v571 = vadd.f32 %v385, %v570
      %v572 = vpop.f32.mrf.mxu0
      %v573 = vadd.f32 %v390, %v572
      %v574 = vpop.f32.mrf.mxu0
      %v575 = vadd.f32 %v390, %v574
      %576 = vmatprep.mubr.bf16.mxu0 0
      %577 = vmatmul.mubr.bf16.gmra.mxu0 %v486
      %v578 = vpop.f32.mrf.mxu0
      %v579 = vadd.f32 %v395, %v578
      %v580 = vpop.f32.mrf.mxu0
      %v581 = vadd.f32 %v395, %v580
      %v582 = vpop.f32.mrf.mxu0
      %v583 = vadd.f32 %v400, %v582
      %v584 = vpop.f32.mrf.mxu0
      %v585 = vadd.f32 %v400, %v584
      %586 = vmatprep.mubr.bf16.mxu0 0
      %587 = vmatmul.mubr.bf16.gmra.mxu0 %v489
      %v588 = vpop.f32.mrf.mxu0
      %v589 = vadd.f32 %v405, %v588
      %v590 = vpop.f32.mrf.mxu0
      %v591 = vadd.f32 %v405, %v590
      %v592 = vpop.f32.mrf.mxu0
      %v593 = vadd.f32 %v410, %v592
      %v594 = vpop.f32.mrf.mxu0
      %v595 = vadd.f32 %v410, %v594
      %596 = vmatprep.mubr.bf16.mxu0 0
      %597 = vmatmul.mubr.bf16.gmra.mxu0 %v492
      %v598 = vpop.f32.mrf.mxu0
      %v599 = vadd.f32 %v415, %v598
      %v600 = vpop.f32.mrf.mxu0
      %v601 = vadd.f32 %v415, %v600
      %v602 = vpop.f32.mrf.mxu0
      %v603 = vadd.f32 %v420, %v602
      %v604 = vpop.f32.mrf.mxu0
      %v605 = vadd.f32 %v420, %v604
      %606 = vmatprep.mubr.bf16.mxu0 0
      %607 = vmatmul.mubr.bf16.gmra.mxu0 %v495
      %v608 = vpop.f32.mrf.mxu0
      %v609 = vadd.f32 %v425, %v608
      %v610 = vpop.f32.mrf.mxu0
      %v611 = vadd.f32 %v425, %v610
      %v612 = vpop.f32.mrf.mxu0
      %v613 = vadd.f32 %v430, %v612
      %v614 = vpop.f32.mrf.mxu0
      %v615 = vadd.f32 %v430, %v614
      %616 = vdwg.mxu0
      %v617 = vmax.f32 %v539, 0.0
      %v618 = vmax.f32 %v541, 0.0
      %v619 = vmax.f32 %v543, 0.0
      %v620 = vmax.f32 %v545, 0.0
      %v621 = vmax.f32 %v549, 0.0
      %v622 = vmax.f32 %v551, 0.0
      %v623 = vmax.f32 %v553, 0.0
      %v624 = vmax.f32 %v555, 0.0
      %v625 = vmax.f32 %v559, 0.0
      %v626 = vmax.f32 %v561, 0.0
      %v627 = vmax.f32 %v563, 0.0
      %v628 = vmax.f32 %v565, 0.0
      %v629 = vmax.f32 %v569, 0.0
      %v630 = vmax.f32 %v571, 0.0
      %v631 = vmax.f32 %v573, 0.0
      %v632 = vmax.f32 %v575, 0.0
      %v633 = vmax.f32 %v579, 0.0
      %v634 = vmax.f32 %v581, 0.0
      %v635 = vmax.f32 %v583, 0.0
      %v636 = vmax.f32 %v585, 0.0
      %v637 = vmax.f32 %v589, 0.0
      %v638 = vmax.f32 %v591, 0.0
      %v639 = vmax.f32 %v593, 0.0
      %v640 = vmax.f32 %v595, 0.0
      %v641 = vmax.f32 %v599, 0.0
      %v642 = vmax.f32 %v601, 0.0
      %v643 = vmax.f32 %v603, 0.0
      %v644 = vmax.f32 %v605, 0.0
      %v645 = vmax.f32 %v609, 0.0
      %v646 = vmax.f32 %v611, 0.0
      %v647 = vmax.f32 %v613, 0.0
      %v648 = vmax.f32 %v615, 0.0
      %v649 = vpack.c.bf16 %v619, %v617
      %v650 = vpack.c.bf16 %v620, %v618
      %v651 = vpack.c.bf16 %v623, %v621
      %v652 = vpack.c.bf16 %v624, %v622
      %v653 = vpack.c.bf16 %v627, %v625
      %v654 = vpack.c.bf16 %v628, %v626
      %v655 = vpack.c.bf16 %v631, %v629
      %v656 = vpack.c.bf16 %v632, %v630
      %v657 = vpack.c.bf16 %v635, %v633
      %v658 = vpack.c.bf16 %v636, %v634
      %v659 = vpack.c.bf16 %v639, %v637
      %v660 = vpack.c.bf16 %v640, %v638
      %v661 = vpack.c.bf16 %v643, %v641
      %v662 = vpack.c.bf16 %v644, %v642
      %v663 = vpack.c.bf16 %v647, %v645
      %v664 = vpack.c.bf16 %v648, %v646
      %v665 = vld [vmem:[%s5] sm:$0xf]
      %v666 = vld [vmem:[%s5 + $0x4] sm:$0xf]
      %v667 = vld [vmem:[%s5 + $0x8] sm:$0xf]
      %v668 = vld [vmem:[%s5 + $0xc] sm:$0xf]
      %v669 = vld [vmem:[%s5 + $0x10] sm:$0xf]
      %v670 = vld [vmem:[%s5 + $0x14] sm:$0xf]
      %v671 = vld [vmem:[%s5 + $0x18] sm:$0xf]
      %v672 = vld [vmem:[%s5 + $0x1c] sm:$0xf]
      %v673 = vld [vmem:[%s5 + $0x20] sm:$0xf]
      %v674 = vld [vmem:[%s5 + $0x24] sm:$0xf]
      %v675 = vld [vmem:[%s5 + $0x28] sm:$0xf]
      %v676 = vld [vmem:[%s5 + $0x2c] sm:$0xf]
      %v677 = vld [vmem:[%s5 + $0x30] sm:$0xf]
      %v678 = vld [vmem:[%s5 + $0x34] sm:$0xf]
      %v679 = vld [vmem:[%s5 + $0x38] sm:$0xf]
      %v680 = vld [vmem:[%s5 + $0x3c] sm:$0xf]
      %v681 = vld [vmem:[%s5 + $0x40] sm:$0xf]
      %v682 = vld [vmem:[%s5 + $0x44] sm:$0xf]
      %v683 = vld [vmem:[%s5 + $0x48] sm:$0xf]
      %v684 = vld [vmem:[%s5 + $0x4c] sm:$0xf]
      %v685 = vld [vmem:[%s5 + $0x50] sm:$0xf]
      %v686 = vld [vmem:[%s5 + $0x54] sm:$0xf]
      %v687 = vld [vmem:[%s5 + $0x58] sm:$0xf]
      %v688 = vld [vmem:[%s5 + $0x5c] sm:$0xf]
      %v689 = vld [vmem:[%s5 + $0x60] sm:$0xf]
      %v690 = vld [vmem:[%s5 + $0x64] sm:$0xf]
      %v691 = vld [vmem:[%s5 + $0x68] sm:$0xf]
      %v692 = vld [vmem:[%s5 + $0x6c] sm:$0xf]
      %v693 = vld [vmem:[%s5 + $0x70] sm:$0xf]
      %v694 = vld [vmem:[%s5 + $0x74] sm:$0xf]
      %v695 = vld [vmem:[%s5 + $0x78] sm:$0xf]
      %v696 = vld [vmem:[%s5 + $0x7c] sm:$0xf]
      %v697 = vld [vmem:[%s5 + $0x80] sm:$0xf]
      %v698 = vld [vmem:[%s5 + $0x84] sm:$0xf]
      %v699 = vld [vmem:[%s5 + $0x88] sm:$0xf]
      %v700 = vld [vmem:[%s5 + $0x8c] sm:$0xf]
      %v737 = vunpack.c.l.b16 %v665
      %v738 = vunpack.c.l.b16 %v666
      %v739 = vunpack.c.l.b16 %v667
      %v740 = vunpack.c.l.b16 %v668
      %v741 = vunpack.c.l.b16 %v669
      %v742 = vunpack.c.l.b16 %v670
      %v743 = vunpack.c.l.b16 %v671
      %v744 = vunpack.c.l.b16 %v672
      %v745 = vunpack.c.l.b16 %v673
      %v746 = vunpack.c.l.b16 %v674
      %v747 = vunpack.c.l.b16 %v675
      %v748 = vunpack.c.l.b16 %v676
      %v749 = vunpack.c.l.b16 %v677
      %v750 = vunpack.c.l.b16 %v678
      %v751 = vunpack.c.l.b16 %v679
      %v752 = vunpack.c.l.b16 %v680
      %v753 = vunpack.c.l.b16 %v681
      %v754 = vunpack.c.l.b16 %v682
      %v755 = vunpack.c.l.b16 %v683
      %v756 = vunpack.c.l.b16 %v684
      %v757 = vunpack.c.l.b16 %v685
      %v758 = vunpack.c.l.b16 %v686
      %v759 = vunpack.c.l.b16 %v687
      %v760 = vunpack.c.l.b16 %v688
      %v761 = vunpack.c.l.b16 %v689
      %v762 = vunpack.c.l.b16 %v690
      %v763 = vunpack.c.l.b16 %v691
      %v764 = vunpack.c.l.b16 %v692
      %v765 = vunpack.c.l.b16 %v693
      %v766 = vunpack.c.l.b16 %v694
      %v767 = vunpack.c.l.b16 %v695
      %v768 = vunpack.c.l.b16 %v696
      %v769 = vunpack.c.l.b16 %v697
      %v770 = vunpack.c.l.b16 %v698
      %v771 = vunpack.c.l.b16 %v699
      %v772 = vunpack.c.l.b16 %v700
      %v773 = vpack.c.b16 %v738, %v737
      %v774 = vpack.c.b16 %v740, %v739
      %v775 = vpack.c.b16 %v742, %v741
      %v776 = vpack.c.b16 %v744, %v743
      %v777 = vpack.c.b16 %v746, %v745
      %v778 = vpack.c.b16 %v748, %v747
      %v779 = vpack.c.b16 %v750, %v749
      %v780 = vpack.c.b16 %v752, %v751
      %v781 = vpack.c.b16 %v754, %v753
      %v782 = vpack.c.b16 %v756, %v755
      %v783 = vpack.c.b16 %v758, %v757
      %v784 = vpack.c.b16 %v760, %v759
      %v785 = vpack.c.b16 %v762, %v761
      %v786 = vpack.c.b16 %v764, %v763
      %v787 = vpack.c.b16 %v766, %v765
      %v788 = vpack.c.b16 %v768, %v767
      %v789 = vpack.c.b16 %v770, %v769
      %v790 = vpack.c.b16 %v772, %v771
      %809 = vmatprep.subr.bf16.mxu0 %v664
      %810 = vmatpush1.bf16.msra.mxu0 %v663
      %811 = vmatprep.subr.bf16.mxu0 %v662
      %812 = vmatpush1.bf16.msra.mxu0 %v661
      %813 = vmatprep.subr.bf16.mxu0 %v660
      %814 = vmatpush1.bf16.msra.mxu0 %v659
      %815 = vmatprep.subr.bf16.mxu0 %v658
      %816 = vmatpush1.bf16.msra.mxu0 %v657
      %817 = vmatprep.subr.bf16.mxu0 %v656
      %818 = vmatpush1.bf16.msra.mxu0 %v655
      %819 = vmatprep.subr.bf16.mxu0 %v654
      %820 = vmatpush1.bf16.msra.mxu0 %v653
      %821 = vmatprep.subr.bf16.mxu0 %v652
      %822 = vmatpush1.bf16.msra.mxu0 %v651
      %823 = vmatprep.subr.bf16.mxu0 %v650
      %824 = vmatpush1.bf16.msra.mxu0 %v649
      %825 = vmatprep.subr.bf16.mxu0 0
      %826 = vmatpush2.bf16.msra.mxu0 0
      %827 = vmatprep.subr.bf16.mxu0 0
      %828 = vmatpush2.bf16.msra.mxu0 0
      %829 = vmatprep.subr.bf16.mxu0 0
      %830 = vmatpush2.bf16.msra.mxu0 0
      %831 = vmatprep.subr.bf16.mxu0 0
      %832 = vmatpush2.bf16.msra.mxu0 0
      %833 = vmatprep.subr.bf16.mxu0 0
      %834 = vmatpush2.bf16.msra.mxu0 0
      %835 = vmatprep.subr.bf16.mxu0 0
      %836 = vmatpush2.bf16.msra.mxu0 0
      %837 = vmatprep.subr.bf16.mxu0 0
      %838 = vmatpush2.bf16.msra.mxu0 0
      %839 = vmatprep.subr.bf16.mxu0 0
      %840 = vmatpush2.bf16.msra.mxu0 0
      %841 = vmatprep.mubr.bf16.mxu0 0
      %842 = vmatmul.mubr.bf16.gmra.mxu0 %v773
      %v843 = vpop.f32.mrf.mxu0
      %v844 = vadd.f32 0.0, %v843
      %v845 = vpop.f32.mrf.mxu0
      %v846 = vadd.f32 0.0, %v845
      %v847 = vpop.f32.mrf.mxu0
      %v848 = vadd.f32 0.0, %v847
      %v849 = vpop.f32.mrf.mxu0
      %v850 = vadd.f32 0.0, %v849
      %851 = vmatprep.mubr.bf16.mxu0 0
      %852 = vmatmul.mubr.bf16.gmra.mxu0 %v774
      %v853 = vpop.f32.mrf.mxu0
      %v854 = vadd.f32 0.0, %v853
      %v855 = vpop.f32.mrf.mxu0
      %v856 = vadd.f32 0.0, %v855
      %v857 = vpop.f32.mrf.mxu0
      %v858 = vadd.f32 0.0, %v857
      %v859 = vpop.f32.mrf.mxu0
      %v860 = vadd.f32 0.0, %v859
      %861 = vmatprep.mubr.bf16.mxu0 0
      %862 = vmatmul.mubr.bf16.gmra.mxu0 %v775
      %v863 = vpop.f32.mrf.mxu0
      %v864 = vadd.f32 0.0, %v863
      %v865 = vpop.f32.mrf.mxu0
      %v866 = vadd.f32 0.0, %v865
      %v867 = vpop.f32.mrf.mxu0
      %v868 = vadd.f32 0.0, %v867
      %v869 = vpop.f32.mrf.mxu0
      %v870 = vadd.f32 0.0, %v869
      %871 = vmatprep.mubr.bf16.mxu0 0
      %872 = vmatmul.mubr.bf16.gmra.mxu0 %v776
      %v873 = vpop.f32.mrf.mxu0
      %v874 = vadd.f32 0.0, %v873
      %v875 = vpop.f32.mrf.mxu0
      %v876 = vadd.f32 0.0, %v875
      %v877 = vpop.f32.mrf.mxu0
      %v878 = vadd.f32 0.0, %v877
      %v879 = vpop.f32.mrf.mxu0
      %v880 = vadd.f32 0.0, %v879
      %881 = vmatprep.mubr.bf16.mxu0 0
      %882 = vmatmul.mubr.bf16.gmra.mxu0 %v777
      %v883 = vpop.f32.mrf.mxu0
      %v884 = vadd.f32 0.0, %v883
      %v885 = vpop.f32.mrf.mxu0
      %v886 = vadd.f32 0.0, %v885
      %v887 = vpop.f32.mrf.mxu0
      %v888 = vadd.f32 0.0, %v887
      %v889 = vpop.f32.mrf.mxu0
      %v890 = vadd.f32 0.0, %v889
      %891 = vmatprep.mubr.bf16.mxu0 0
      %892 = vmatmul.mubr.bf16.gmra.mxu0 %v778
      %v893 = vpop.f32.mrf.mxu0
      %v894 = vadd.f32 0.0, %v893
      %v895 = vpop.f32.mrf.mxu0
      %v896 = vadd.f32 0.0, %v895
      %v897 = vpop.f32.mrf.mxu0
      %v898 = vadd.f32 0.0, %v897
      %v899 = vpop.f32.mrf.mxu0
      %v900 = vadd.f32 0.0, %v899
      %901 = vmatprep.mubr.bf16.mxu0 0
      %902 = vmatmul.mubr.bf16.gmra.mxu0 %v779
      %v903 = vpop.f32.mrf.mxu0
      %v904 = vadd.f32 0.0, %v903
      %v905 = vpop.f32.mrf.mxu0
      %v906 = vadd.f32 0.0, %v905
      %v907 = vpop.f32.mrf.mxu0
      %v908 = vadd.f32 0.0, %v907
      %v909 = vpop.f32.mrf.mxu0
      %v910 = vadd.f32 0.0, %v909
      %911 = vmatprep.mubr.bf16.mxu0 0
      %912 = vmatmul.mubr.bf16.gmra.mxu0 %v780
      %v913 = vpop.f32.mrf.mxu0
      %v914 = vadd.f32 0.0, %v913
      %v915 = vpop.f32.mrf.mxu0
      %v916 = vadd.f32 0.0, %v915
      %v917 = vpop.f32.mrf.mxu0
      %v918 = vadd.f32 0.0, %v917
      %v919 = vpop.f32.mrf.mxu0
      %v920 = vadd.f32 0.0, %v919
      %921 = vmatprep.mubr.bf16.mxu0 0
      %922 = vmatmul.mubr.bf16.gmra.mxu0 %v781
      %v923 = vpop.f32.mrf.mxu0
      %v924 = vadd.f32 0.0, %v923
      %v925 = vpop.f32.mrf.mxu0
      %v926 = vadd.f32 0.0, %v925
      %v927 = vpop.f32.mrf.mxu0
      %v928 = vadd.f32 0.0, %v927
      %v929 = vpop.f32.mrf.mxu0
      %v930 = vadd.f32 0.0, %v929
      %931 = vmatprep.mubr.bf16.mxu0 0
      %932 = vmatmul.mubr.bf16.gmra.mxu0 %v782
      %v933 = vpop.f32.mrf.mxu0
      %v934 = vadd.f32 0.0, %v933
      %v935 = vpop.f32.mrf.mxu0
      %v936 = vadd.f32 0.0, %v935
      %v937 = vpop.f32.mrf.mxu0
      %v938 = vadd.f32 0.0, %v937
      %v939 = vpop.f32.mrf.mxu0
      %v940 = vadd.f32 0.0, %v939
      %941 = vmatprep.mubr.bf16.mxu0 0
      %942 = vmatmul.mubr.bf16.gmra.mxu0 %v783
      %v943 = vpop.f32.mrf.mxu0
      %v944 = vadd.f32 0.0, %v943
      %v945 = vpop.f32.mrf.mxu0
      %v946 = vadd.f32 0.0, %v945
      %v947 = vpop.f32.mrf.mxu0
      %v948 = vadd.f32 0.0, %v947
      %v949 = vpop.f32.mrf.mxu0
      %v950 = vadd.f32 0.0, %v949
      %951 = vmatprep.mubr.bf16.mxu0 0
      %952 = vmatmul.mubr.bf16.gmra.mxu0 %v784
      %v953 = vpop.f32.mrf.mxu0
      %v954 = vadd.f32 0.0, %v953
      %v955 = vpop.f32.mrf.mxu0
      %v956 = vadd.f32 0.0, %v955
      %v957 = vpop.f32.mrf.mxu0
      %v958 = vadd.f32 0.0, %v957
      %v959 = vpop.f32.mrf.mxu0
      %v960 = vadd.f32 0.0, %v959
      %961 = vmatprep.mubr.bf16.mxu0 0
      %962 = vmatmul.mubr.bf16.gmra.mxu0 %v785
      %v963 = vpop.f32.mrf.mxu0
      %v964 = vadd.f32 0.0, %v963
      %v965 = vpop.f32.mrf.mxu0
      %v966 = vadd.f32 0.0, %v965
      %v967 = vpop.f32.mrf.mxu0
      %v968 = vadd.f32 0.0, %v967
      %v969 = vpop.f32.mrf.mxu0
      %v970 = vadd.f32 0.0, %v969
      %971 = vmatprep.mubr.bf16.mxu0 0
      %972 = vmatmul.mubr.bf16.gmra.mxu0 %v786
      %v973 = vpop.f32.mrf.mxu0
      %v974 = vadd.f32 0.0, %v973
      %v975 = vpop.f32.mrf.mxu0
      %v976 = vadd.f32 0.0, %v975
      %v977 = vpop.f32.mrf.mxu0
      %v978 = vadd.f32 0.0, %v977
      %v979 = vpop.f32.mrf.mxu0
      %v980 = vadd.f32 0.0, %v979
      %981 = vmatprep.mubr.bf16.mxu0 0
      %982 = vmatmul.mubr.bf16.gmra.mxu0 %v787
      %v983 = vpop.f32.mrf.mxu0
      %v984 = vadd.f32 0.0, %v983
      %v985 = vpop.f32.mrf.mxu0
      %v986 = vadd.f32 0.0, %v985
      %v987 = vpop.f32.mrf.mxu0
      %v988 = vadd.f32 0.0, %v987
      %v989 = vpop.f32.mrf.mxu0
      %v990 = vadd.f32 0.0, %v989
      %991 = vmatprep.mubr.bf16.mxu0 0
      %992 = vmatmul.mubr.bf16.gmra.mxu0 %v788
      %v993 = vpop.f32.mrf.mxu0
      %v994 = vadd.f32 0.0, %v993
      %v995 = vpop.f32.mrf.mxu0
      %v996 = vadd.f32 0.0, %v995
      %v997 = vpop.f32.mrf.mxu0
      %v998 = vadd.f32 0.0, %v997
      %v999 = vpop.f32.mrf.mxu0
      %v1000 = vadd.f32 0.0, %v999
      %1001 = vmatprep.mubr.bf16.mxu0 0
      %1002 = vmatmul.mubr.bf16.gmra.mxu0 %v789
      %v1003 = vpop.f32.mrf.mxu0
      %v1004 = vadd.f32 0.0, %v1003
      %v1005 = vpop.f32.mrf.mxu0
      %v1006 = vadd.f32 0.0, %v1005
      %v1007 = vpop.f32.mrf.mxu0
      %v1008 = vadd.f32 0.0, %v1007
      %v1009 = vpop.f32.mrf.mxu0
      %v1010 = vadd.f32 0.0, %v1009
      %1011 = vmatprep.mubr.bf16.mxu0 0
      %1012 = vmatmul.mubr.bf16.gmra.mxu0 %v790
      %v1013 = vpop.f32.mrf.mxu0
      %v1014 = vadd.f32 0.0, %v1013
      %v1015 = vpop.f32.mrf.mxu0
      %v1016 = vadd.f32 0.0, %v1015
      %v1017 = vpop.f32.mrf.mxu0
      %v1018 = vadd.f32 0.0, %v1017
      %v1019 = vpop.f32.mrf.mxu0
      %v1020 = vadd.f32 0.0, %v1019
      %1021 = vdwg.mxu0
      %1022 = vst [vmem:[#allocation2] sm:$0xff] %v844
      %1023 = vst [vmem:[#allocation2 + $0x8] sm:$0xff] %v846
      %1024 = vst [vmem:[#allocation2 + $0x10] sm:$0xff] %v848
      %1025 = vst [vmem:[#allocation2 + $0x18] sm:$0xff] %v850
      %1026 = vst [vmem:[#allocation2 + $0x20] sm:$0xff] %v854
      %1027 = vst [vmem:[#allocation2 + $0x28] sm:$0xff] %v856
      %1028 = vst [vmem:[#allocation2 + $0x30] sm:$0xff] %v858
      %1029 = vst [vmem:[#allocation2 + $0x38] sm:$0xff] %v860
      %1030 = vst [vmem:[#allocation2 + $0x40] sm:$0xff] %v864
      %1031 = vst [vmem:[#allocation2 + $0x48] sm:$0xff] %v866
      %1032 = vst [vmem:[#allocation2 + $0x50] sm:$0xff] %v868
      %1033 = vst [vmem:[#allocation2 + $0x58] sm:$0xff] %v870
      %1034 = vst [vmem:[#allocation2 + $0x60] sm:$0xff] %v874
      %1035 = vst [vmem:[#allocation2 + $0x68] sm:$0xff] %v876
      %1036 = vst [vmem:[#allocation2 + $0x70] sm:$0xff] %v878
      %1037 = vst [vmem:[#allocation2 + $0x78] sm:$0xff] %v880
      %1038 = vst [vmem:[#allocation2 + $0x80] sm:$0xff] %v884
      %1039 = vst [vmem:[#allocation2 + $0x88] sm:$0xff] %v886
      %1040 = vst [vmem:[#allocation2 + $0x90] sm:$0xff] %v888
      %1041 = vst [vmem:[#allocation2 + $0x98] sm:$0xff] %v890
      %1042 = vst [vmem:[#allocation2 + $0xa0] sm:$0xff] %v894
      %1043 = vst [vmem:[#allocation2 + $0xa8] sm:$0xff] %v896
      %1044 = vst [vmem:[#allocation2 + $0xb0] sm:$0xff] %v898
      %1045 = vst [vmem:[#allocation2 + $0xb8] sm:$0xff] %v900
      %1046 = vst [vmem:[#allocation2 + $0xc0] sm:$0xff] %v904
      %1047 = vst [vmem:[#allocation2 + $0xc8] sm:$0xff] %v906
      %1048 = vst [vmem:[#allocation2 + $0xd0] sm:$0xff] %v908
      %1049 = vst [vmem:[#allocation2 + $0xd8] sm:$0xff] %v910
      %1050 = vst [vmem:[#allocation2 + $0xe0] sm:$0xff] %v914
      %1051 = vst [vmem:[#allocation2 + $0xe8] sm:$0xff] %v916
      %1052 = vst [vmem:[#allocation2 + $0xf0] sm:$0xff] %v918
      %1053 = vst [vmem:[#allocation2 + $0xf8] sm:$0xff] %v920
      %1054 = vst [vmem:[#allocation2 + $0x100] sm:$0xff] %v924
      %1055 = vst [vmem:[#allocation2 + $0x108] sm:$0xff] %v926
      %1056 = vst [vmem:[#allocation2 + $0x110] sm:$0xff] %v928
      %1057 = vst [vmem:[#allocation2 + $0x118] sm:$0xff] %v930
      %1058 = vst [vmem:[#allocation2 + $0x120] sm:$0xff] %v934
      %1059 = vst [vmem:[#allocation2 + $0x128] sm:$0xff] %v936
      %1060 = vst [vmem:[#allocation2 + $0x130] sm:$0xff] %v938
      %1061 = vst [vmem:[#allocation2 + $0x138] sm:$0xff] %v940
      %1062 = vst [vmem:[#allocation2 + $0x140] sm:$0xff] %v944
      %1063 = vst [vmem:[#allocation2 + $0x148] sm:$0xff] %v946
      %1064 = vst [vmem:[#allocation2 + $0x150] sm:$0xff] %v948
      %1065 = vst [vmem:[#allocation2 + $0x158] sm:$0xff] %v950
      %1066 = vst [vmem:[#allocation2 + $0x160] sm:$0xff] %v954
      %1067 = vst [vmem:[#allocation2 + $0x168] sm:$0xff] %v956
      %1068 = vst [vmem:[#allocation2 + $0x170] sm:$0xff] %v958
      %1069 = vst [vmem:[#allocation2 + $0x178] sm:$0xff] %v960
      %1070 = vst [vmem:[#allocation2 + $0x180] sm:$0xff] %v964
      %1071 = vst [vmem:[#allocation2 + $0x188] sm:$0xff] %v966
      %1072 = vst [vmem:[#allocation2 + $0x190] sm:$0xff] %v968
      %1073 = vst [vmem:[#allocation2 + $0x198] sm:$0xff] %v970
      %1074 = vst [vmem:[#allocation2 + $0x1a0] sm:$0xff] %v974
      %1075 = vst [vmem:[#allocation2 + $0x1a8] sm:$0xff] %v976
      %1076 = vst [vmem:[#allocation2 + $0x1b0] sm:$0xff] %v978
      %1077 = vst [vmem:[#allocation2 + $0x1b8] sm:$0xff] %v980
      %1078 = vst [vmem:[#allocation2 + $0x1c0] sm:$0xff] %v984
      %1079 = vst [vmem:[#allocation2 + $0x1c8] sm:$0xff] %v986
      %1080 = vst [vmem:[#allocation2 + $0x1d0] sm:$0xff] %v988
      %1081 = vst [vmem:[#allocation2 + $0x1d8] sm:$0xff] %v990
      %1082 = vst [vmem:[#allocation2 + $0x1e0] sm:$0xff] %v994
      %1083 = vst [vmem:[#allocation2 + $0x1e8] sm:$0xff] %v996
      %1084 = vst [vmem:[#allocation2 + $0x1f0] sm:$0xff] %v998
      %1085 = vst [vmem:[#allocation2 + $0x1f8] sm:$0xff] %v1000
      %1086 = vst [vmem:[#allocation2 + $0x200] sm:$0xff] %v1004
      %1087 = vst [vmem:[#allocation2 + $0x208] sm:$0xff] %v1006
      %1088 = vst [vmem:[#allocation2 + $0x210] sm:$0xff] %v1008
      %1089 = vst [vmem:[#allocation2 + $0x218] sm:$0xff] %v1010
      %1090 = vst [vmem:[#allocation2 + $0x220] sm:$0xff] %v1014
      %1091 = vst [vmem:[#allocation2 + $0x228] sm:$0xff] %v1016
      %1092 = vst [vmem:[#allocation2 + $0x230] sm:$0xff] %v1018
      %1093 = vst [vmem:[#allocation2 + $0x238] sm:$0xff] %v1020
      %v1094 = vlaneseq
      %v1095 = vand.u32 %v1094, 127
      %v1096 = vadd.s32 %v1095, 128
      %v1097 = vand.u32 %v1095, 15
      %v1098 = vand.u32 %v1096, 15
      %vm1099 = vcmp.ge.s32.totalorder %v1095, 16
      %vm1100 = vcmp.ge.s32.totalorder %v1096, 16
      %vm1101 = vcmp.lt.s32.totalorder %v1095, 240
      %vm1102 = vcmp.lt.s32.totalorder %v1096, 240
      %vm1103 = vcmp.ge.s32.totalorder %v1097, 1
      %vm1104 = vcmp.ge.s32.totalorder %v1098, 1
      %vm1105 = vcmp.le.s32.totalorder %v1097, 14
      %vm1106 = vcmp.le.s32.totalorder %v1098, 14
      %v1107 = vld [vmem:[#allocation2] sm:$0xff]
      %v1108 = vld [vmem:[#allocation2 + $0x8] sm:$0xff]
      %v1109 = vld [vmem:[#allocation2 + $0x10] sm:$0xff]
      %v1110 = vld [vmem:[#allocation2 + $0x18] sm:$0xff]
      %v1111 = vld [vmem:[#allocation2 + $0x20] sm:$0xff]
      %v1112 = vld [vmem:[#allocation2 + $0x28] sm:$0xff]
      %v1113 = vld [vmem:[#allocation2 + $0x30] sm:$0xff]
      %v1114 = vld [vmem:[#allocation2 + $0x38] sm:$0xff]
      %1115 = vrot.lane.b32.xlu0 %v1107, 17
      %v1116 = vpop.permute.xlu0 %1115
      %1117 = vrot.lane.b32.xlu0 %v1109, 17
      %v1118 = vpop.permute.xlu0 %1117
      %1119 = vrot.lane.b32.xlu0 %v1111, 17
      %v1120 = vpop.permute.xlu0 %1119
      %1121 = vrot.lane.b32.xlu0 %v1113, 17
      %v1122 = vpop.permute.xlu0 %1121
      %1123 = vrot.lane.b32.xlu0 %v1108, 17
      %v1124 = vpop.permute.xlu0 %1123
      %1125 = vrot.lane.b32.xlu0 %v1110, 17
      %v1126 = vpop.permute.xlu0 %1125
      %1127 = vrot.lane.b32.xlu0 %v1112, 17
      %v1128 = vpop.permute.xlu0 %1127
      %1129 = vrot.lane.b32.xlu0 %v1114, 17
      %v1130 = vpop.permute.xlu0 %1129
      %vm1131 = vcmp.lt.s32.totalorder %v1095, 17
      %v1132 = vsel %vm1131, %v1116, %v1124
      %v1133 = vsel %vm1131, %v1118, %v1126
      %v1134 = vsel %vm1131, %v1120, %v1128
      %v1135 = vsel %vm1131, %v1122, %v1130
      %v1136 = vsel %vm1131, %v1124, %v1116
      %v1137 = vsel %vm1131, %v1126, %v1118
      %v1138 = vsel %vm1131, %v1128, %v1120
      %v1139 = vsel %vm1131, %v1130, %v1122
      %vm1140 = vmand %vm1099, %vm1103
      %vm1141 = vmand %vm1100, %vm1104
      %v1142 = vsel %vm1140, %v1136, 0.0
      %v1143 = vsel %vm1141, %v1132, 0.0
      %v1144 = vsel %vm1140, %v1137, 0.0
      %v1145 = vsel %vm1141, %v1133, 0.0
      %v1146 = vsel %vm1140, %v1138, 0.0
      %v1147 = vsel %vm1141, %v1134, 0.0
      %v1148 = vsel %vm1140, %v1139, 0.0
      %v1149 = vsel %vm1141, %v1135, 0.0
      %v1150 = vadd.f32 %v1142, 0.0
      %v1151 = vadd.f32 %v1143, 0.0
      %v1152 = vadd.f32 %v1144, 0.0
      %v1153 = vadd.f32 %v1145, 0.0
      %v1154 = vadd.f32 %v1146, 0.0
      %v1155 = vadd.f32 %v1147, 0.0
      %v1156 = vadd.f32 %v1148, 0.0
      %v1157 = vadd.f32 %v1149, 0.0
      %v1158 = vld [vmem:[#allocation2 + $0x40] sm:$0xff]
      %v1159 = vld [vmem:[#allocation2 + $0x48] sm:$0xff]
      %v1160 = vld [vmem:[#allocation2 + $0x50] sm:$0xff]
      %v1161 = vld [vmem:[#allocation2 + $0x58] sm:$0xff]
      %v1162 = vld [vmem:[#allocation2 + $0x60] sm:$0xff]
      %v1163 = vld [vmem:[#allocation2 + $0x68] sm:$0xff]
      %v1164 = vld [vmem:[#allocation2 + $0x70] sm:$0xff]
      %v1165 = vld [vmem:[#allocation2 + $0x78] sm:$0xff]
      %1166 = vrot.lane.b32.xlu0 %v1158, 16
      %v1167 = vpop.permute.xlu0 %1166
      %1168 = vrot.lane.b32.xlu0 %v1160, 16
      %v1169 = vpop.permute.xlu0 %1168
      %1170 = vrot.lane.b32.xlu0 %v1162, 16
      %v1171 = vpop.permute.xlu0 %1170
      %1172 = vrot.lane.b32.xlu0 %v1164, 16
      %v1173 = vpop.permute.xlu0 %1172
      %1174 = vrot.lane.b32.xlu0 %v1159, 16
      %v1175 = vpop.permute.xlu0 %1174
      %1176 = vrot.lane.b32.xlu0 %v1161, 16
      %v1177 = vpop.permute.xlu0 %1176
      %1178 = vrot.lane.b32.xlu0 %v1163, 16
      %v1179 = vpop.permute.xlu0 %1178
      %1180 = vrot.lane.b32.xlu0 %v1165, 16
      %v1181 = vpop.permute.xlu0 %1180
      %vm1182 = vcmp.lt.s32.totalorder %v1095, 16
      %v1183 = vsel %vm1182, %v1167, %v1175
      %v1184 = vsel %vm1182, %v1169, %v1177
      %v1185 = vsel %vm1182, %v1171, %v1179
      %v1186 = vsel %vm1182, %v1173, %v1181
      %v1187 = vsel %vm1182, %v1175, %v1167
      %v1188 = vsel %vm1182, %v1177, %v1169
      %v1189 = vsel %vm1182, %v1179, %v1171
      %v1190 = vsel %vm1182, %v1181, %v1173
      %v1191 = vsel %vm1099, %v1187, 0.0
      %v1192 = vsel %vm1100, %v1183, 0.0
      %v1193 = vsel %vm1099, %v1188, 0.0
      %v1194 = vsel %vm1100, %v1184, 0.0
      %v1195 = vsel %vm1099, %v1189, 0.0
      %v1196 = vsel %vm1100, %v1185, 0.0
      %v1197 = vsel %vm1099, %v1190, 0.0
      %v1198 = vsel %vm1100, %v1186, 0.0
      %v1199 = vadd.f32 %v1150, %v1191
      %v1200 = vadd.f32 %v1151, %v1192
      %v1201 = vadd.f32 %v1152, %v1193
      %v1202 = vadd.f32 %v1153, %v1194
      %v1203 = vadd.f32 %v1154, %v1195
      %v1204 = vadd.f32 %v1155, %v1196
      %v1205 = vadd.f32 %v1156, %v1197
      %v1206 = vadd.f32 %v1157, %v1198
      %v1207 = vld [vmem:[#allocation2 + $0x80] sm:$0xff]
      %v1208 = vld [vmem:[#allocation2 + $0x88] sm:$0xff]
      %v1209 = vld [vmem:[#allocation2 + $0x90] sm:$0xff]
      %v1210 = vld [vmem:[#allocation2 + $0x98] sm:$0xff]
      %v1211 = vld [vmem:[#allocation2 + $0xa0] sm:$0xff]
      %v1212 = vld [vmem:[#allocation2 + $0xa8] sm:$0xff]
      %v1213 = vld [vmem:[#allocation2 + $0xb0] sm:$0xff]
      %v1214 = vld [vmem:[#allocation2 + $0xb8] sm:$0xff]
      %1215 = vrot.lane.b32.xlu0 %v1207, 15
      %v1216 = vpop.permute.xlu0 %1215
      %1217 = vrot.lane.b32.xlu0 %v1209, 15
      %v1218 = vpop.permute.xlu0 %1217
      %1219 = vrot.lane.b32.xlu0 %v1211, 15
      %v1220 = vpop.permute.xlu0 %1219
      %1221 = vrot.lane.b32.xlu0 %v1213, 15
      %v1222 = vpop.permute.xlu0 %1221
      %1223 = vrot.lane.b32.xlu0 %v1208, 15
      %v1224 = vpop.permute.xlu0 %1223
      %1225 = vrot.lane.b32.xlu0 %v1210, 15
      %v1226 = vpop.permute.xlu0 %1225
      %1227 = vrot.lane.b32.xlu0 %v1212, 15
      %v1228 = vpop.permute.xlu0 %1227
      %1229 = vrot.lane.b32.xlu0 %v1214, 15
      %v1230 = vpop.permute.xlu0 %1229
      %vm1231 = vcmp.lt.s32.totalorder %v1095, 15
      %v1232 = vsel %vm1231, %v1216, %v1224
      %v1233 = vsel %vm1231, %v1218, %v1226
      %v1234 = vsel %vm1231, %v1220, %v1228
      %v1235 = vsel %vm1231, %v1222, %v1230
      %v1236 = vsel %vm1231, %v1224, %v1216
      %v1237 = vsel %vm1231, %v1226, %v1218
      %v1238 = vsel %vm1231, %v1228, %v1220
      %v1239 = vsel %vm1231, %v1230, %v1222
      %vm1240 = vmand %vm1099, %vm1105
      %vm1241 = vmand %vm1100, %vm1106
      %v1242 = vsel %vm1240, %v1236, 0.0
      %v1243 = vsel %vm1241, %v1232, 0.0
      %v1244 = vsel %vm1240, %v1237, 0.0
      %v1245 = vsel %vm1241, %v1233, 0.0
      %v1246 = vsel %vm1240, %v1238, 0.0
      %v1247 = vsel %vm1241, %v1234, 0.0
      %v1248 = vsel %vm1240, %v1239, 0.0
      %v1249 = vsel %vm1241, %v1235, 0.0
      %v1250 = vadd.f32 %v1199, %v1242
      %v1251 = vadd.f32 %v1200, %v1243
      %v1252 = vadd.f32 %v1201, %v1244
      %v1253 = vadd.f32 %v1202, %v1245
      %v1254 = vadd.f32 %v1203, %v1246
      %v1255 = vadd.f32 %v1204, %v1247
      %v1256 = vadd.f32 %v1205, %v1248
      %v1257 = vadd.f32 %v1206, %v1249
      %v1258 = vld [vmem:[#allocation2 + $0xc0] sm:$0xff]
      %v1259 = vld [vmem:[#allocation2 + $0xc8] sm:$0xff]
      %v1260 = vld [vmem:[#allocation2 + $0xd0] sm:$0xff]
      %v1261 = vld [vmem:[#allocation2 + $0xd8] sm:$0xff]
      %v1262 = vld [vmem:[#allocation2 + $0xe0] sm:$0xff]
      %v1263 = vld [vmem:[#allocation2 + $0xe8] sm:$0xff]
      %v1264 = vld [vmem:[#allocation2 + $0xf0] sm:$0xff]
      %v1265 = vld [vmem:[#allocation2 + $0xf8] sm:$0xff]
      %1266 = vrot.lane.b32.xlu0 %v1258, 1
      %v1267 = vpop.permute.xlu0 %1266
      %1268 = vrot.lane.b32.xlu0 %v1260, 1
      %v1269 = vpop.permute.xlu0 %1268
      %1270 = vrot.lane.b32.xlu0 %v1262, 1
      %v1271 = vpop.permute.xlu0 %1270
      %1272 = vrot.lane.b32.xlu0 %v1264, 1
      %v1273 = vpop.permute.xlu0 %1272
      %1274 = vrot.lane.b32.xlu0 %v1259, 1
      %v1275 = vpop.permute.xlu0 %1274
      %1276 = vrot.lane.b32.xlu0 %v1261, 1
      %v1277 = vpop.permute.xlu0 %1276
      %1278 = vrot.lane.b32.xlu0 %v1263, 1
      %v1279 = vpop.permute.xlu0 %1278
      %1280 = vrot.lane.b32.xlu0 %v1265, 1
      %v1281 = vpop.permute.xlu0 %1280
      %vm1282 = vcmp.lt.s32.totalorder %v1095, 1
      %v1283 = vsel %vm1282, %v1267, %v1275
      %v1284 = vsel %vm1282, %v1269, %v1277
      %v1285 = vsel %vm1282, %v1271, %v1279
      %v1286 = vsel %vm1282, %v1273, %v1281
      %v1287 = vsel %vm1282, %v1275, %v1267
      %v1288 = vsel %vm1282, %v1277, %v1269
      %v1289 = vsel %vm1282, %v1279, %v1271
      %v1290 = vsel %vm1282, %v1281, %v1273
      %v1291 = vsel %vm1103, %v1287, 0.0
      %v1292 = vsel %vm1104, %v1283, 0.0
      %v1293 = vsel %vm1103, %v1288, 0.0
      %v1294 = vsel %vm1104, %v1284, 0.0
      %v1295 = vsel %vm1103, %v1289, 0.0
      %v1296 = vsel %vm1104, %v1285, 0.0
      %v1297 = vsel %vm1103, %v1290, 0.0
      %v1298 = vsel %vm1104, %v1286, 0.0
      %v1299 = vadd.f32 %v1250, %v1291
      %v1300 = vadd.f32 %v1251, %v1292
      %v1301 = vadd.f32 %v1252, %v1293
      %v1302 = vadd.f32 %v1253, %v1294
      %v1303 = vadd.f32 %v1254, %v1295
      %v1304 = vadd.f32 %v1255, %v1296
      %v1305 = vadd.f32 %v1256, %v1297
      %v1306 = vadd.f32 %v1257, %v1298
      %v1307 = vld [vmem:[#allocation2 + $0x100] sm:$0xff]
      %v1308 = vld [vmem:[#allocation2 + $0x108] sm:$0xff]
      %v1309 = vld [vmem:[#allocation2 + $0x110] sm:$0xff]
      %v1310 = vld [vmem:[#allocation2 + $0x118] sm:$0xff]
      %v1311 = vld [vmem:[#allocation2 + $0x120] sm:$0xff]
      %v1312 = vld [vmem:[#allocation2 + $0x128] sm:$0xff]
      %v1313 = vld [vmem:[#allocation2 + $0x130] sm:$0xff]
      %v1314 = vld [vmem:[#allocation2 + $0x138] sm:$0xff]
      %v1315 = vadd.f32 %v1299, %v1307
      %v1316 = vadd.f32 %v1300, %v1308
      %v1317 = vadd.f32 %v1301, %v1309
      %v1318 = vadd.f32 %v1302, %v1310
      %v1319 = vadd.f32 %v1303, %v1311
      %v1320 = vadd.f32 %v1304, %v1312
      %v1321 = vadd.f32 %v1305, %v1313
      %v1322 = vadd.f32 %v1306, %v1314
      %v1323 = vld [vmem:[#allocation2 + $0x140] sm:$0xff]
      %v1324 = vld [vmem:[#allocation2 + $0x148] sm:$0xff]
      %v1325 = vld [vmem:[#allocation2 + $0x150] sm:$0xff]
      %v1326 = vld [vmem:[#allocation2 + $0x158] sm:$0xff]
      %v1327 = vld [vmem:[#allocation2 + $0x160] sm:$0xff]
      %v1328 = vld [vmem:[#allocation2 + $0x168] sm:$0xff]
      %v1329 = vld [vmem:[#allocation2 + $0x170] sm:$0xff]
      %v1330 = vld [vmem:[#allocation2 + $0x178] sm:$0xff]
      %1331 = vrot.lane.b32.xlu0 %v1323, 127
      %v1332 = vpop.permute.xlu0 %1331
      %1333 = vrot.lane.b32.xlu0 %v1325, 127
      %v1334 = vpop.permute.xlu0 %1333
      %1335 = vrot.lane.b32.xlu0 %v1327, 127
      %v1336 = vpop.permute.xlu0 %1335
      %1337 = vrot.lane.b32.xlu0 %v1329, 127
      %v1338 = vpop.permute.xlu0 %1337
      %1339 = vrot.lane.b32.xlu0 %v1324, 127
      %v1340 = vpop.permute.xlu0 %1339
      %1341 = vrot.lane.b32.xlu0 %v1326, 127
      %v1342 = vpop.permute.xlu0 %1341
      %1343 = vrot.lane.b32.xlu0 %v1328, 127
      %v1344 = vpop.permute.xlu0 %1343
      %1345 = vrot.lane.b32.xlu0 %v1330, 127
      %v1346 = vpop.permute.xlu0 %1345
      %vm1347 = vcmp.lt.s32.totalorder %v1095, 127
      %v1348 = vsel %vm1347, %v1332, %v1340
      %v1349 = vsel %vm1347, %v1334, %v1342
      %v1350 = vsel %vm1347, %v1336, %v1344
      %v1351 = vsel %vm1347, %v1338, %v1346
      %v1352 = vsel %vm1347, %v1340, %v1332
      %v1353 = vsel %vm1347, %v1342, %v1334
      %v1354 = vsel %vm1347, %v1344, %v1336
      %v1355 = vsel %vm1347, %v1346, %v1338
      %v1356 = vsel %vm1105, %v1348, 0.0
      %v1357 = vsel %vm1106, %v1352, 0.0
      %v1358 = vsel %vm1105, %v1349, 0.0
      %v1359 = vsel %vm1106, %v1353, 0.0
      %v1360 = vsel %vm1105, %v1350, 0.0
      %v1361 = vsel %vm1106, %v1354, 0.0
      %v1362 = vsel %vm1105, %v1351, 0.0
      %v1363 = vsel %vm1106, %v1355, 0.0
      %v1364 = vadd.f32 %v1315, %v1356
      %v1365 = vadd.f32 %v1316, %v1357
      %v1366 = vadd.f32 %v1317, %v1358
      %v1367 = vadd.f32 %v1318, %v1359
      %v1368 = vadd.f32 %v1319, %v1360
      %v1369 = vadd.f32 %v1320, %v1361
      %v1370 = vadd.f32 %v1321, %v1362
      %v1371 = vadd.f32 %v1322, %v1363
      %v1372 = vld [vmem:[#allocation2 + $0x180] sm:$0xff]
      %v1373 = vld [vmem:[#allocation2 + $0x188] sm:$0xff]
      %v1374 = vld [vmem:[#allocation2 + $0x190] sm:$0xff]
      %v1375 = vld [vmem:[#allocation2 + $0x198] sm:$0xff]
      %v1376 = vld [vmem:[#allocation2 + $0x1a0] sm:$0xff]
      %v1377 = vld [vmem:[#allocation2 + $0x1a8] sm:$0xff]
      %v1378 = vld [vmem:[#allocation2 + $0x1b0] sm:$0xff]
      %v1379 = vld [vmem:[#allocation2 + $0x1b8] sm:$0xff]
      %1380 = vrot.lane.b32.xlu0 %v1372, 113
      %v1381 = vpop.permute.xlu0 %1380
      %1382 = vrot.lane.b32.xlu0 %v1374, 113
      %v1383 = vpop.permute.xlu0 %1382
      %1384 = vrot.lane.b32.xlu0 %v1376, 113
      %v1385 = vpop.permute.xlu0 %1384
      %1386 = vrot.lane.b32.xlu0 %v1378, 113
      %v1387 = vpop.permute.xlu0 %1386
      %1388 = vrot.lane.b32.xlu0 %v1373, 113
      %v1389 = vpop.permute.xlu0 %1388
      %1390 = vrot.lane.b32.xlu0 %v1375, 113
      %v1391 = vpop.permute.xlu0 %1390
      %1392 = vrot.lane.b32.xlu0 %v1377, 113
      %v1393 = vpop.permute.xlu0 %1392
      %1394 = vrot.lane.b32.xlu0 %v1379, 113
      %v1395 = vpop.permute.xlu0 %1394
      %vm1396 = vcmp.lt.s32.totalorder %v1095, 113
      %v1397 = vsel %vm1396, %v1381, %v1389
      %v1398 = vsel %vm1396, %v1383, %v1391
      %v1399 = vsel %vm1396, %v1385, %v1393
      %v1400 = vsel %vm1396, %v1387, %v1395
      %v1401 = vsel %vm1396, %v1389, %v1381
      %v1402 = vsel %vm1396, %v1391, %v1383
      %v1403 = vsel %vm1396, %v1393, %v1385
      %v1404 = vsel %vm1396, %v1395, %v1387
      %vm1405 = vmand %vm1101, %vm1103
      %vm1406 = vmand %vm1102, %vm1104
      %v1407 = vsel %vm1405, %v1397, 0.0
      %v1408 = vsel %vm1406, %v1401, 0.0
      %v1409 = vsel %vm1405, %v1398, 0.0
      %v1410 = vsel %vm1406, %v1402, 0.0
      %v1411 = vsel %vm1405, %v1399, 0.0
      %v1412 = vsel %vm1406, %v1403, 0.0
      %v1413 = vsel %vm1405, %v1400, 0.0
      %v1414 = vsel %vm1406, %v1404, 0.0
      %v1415 = vadd.f32 %v1364, %v1407
      %v1416 = vadd.f32 %v1365, %v1408
      %v1417 = vadd.f32 %v1366, %v1409
      %v1418 = vadd.f32 %v1367, %v1410
      %v1419 = vadd.f32 %v1368, %v1411
      %v1420 = vadd.f32 %v1369, %v1412
      %v1421 = vadd.f32 %v1370, %v1413
      %v1422 = vadd.f32 %v1371, %v1414
      %v1423 = vld [vmem:[#allocation2 + $0x1c0] sm:$0xff]
      %v1424 = vld [vmem:[#allocation2 + $0x1c8] sm:$0xff]
      %v1425 = vld [vmem:[#allocation2 + $0x1d0] sm:$0xff]
      %v1426 = vld [vmem:[#allocation2 + $0x1d8] sm:$0xff]
      %v1427 = vld [vmem:[#allocation2 + $0x1e0] sm:$0xff]
      %v1428 = vld [vmem:[#allocation2 + $0x1e8] sm:$0xff]
      %v1429 = vld [vmem:[#allocation2 + $0x1f0] sm:$0xff]
      %v1430 = vld [vmem:[#allocation2 + $0x1f8] sm:$0xff]
      %1431 = vrot.lane.b32.xlu0 %v1423, 112
      %v1432 = vpop.permute.xlu0 %1431
      %1433 = vrot.lane.b32.xlu0 %v1425, 112
      %v1434 = vpop.permute.xlu0 %1433
      %1435 = vrot.lane.b32.xlu0 %v1427, 112
      %v1436 = vpop.permute.xlu0 %1435
      %1437 = vrot.lane.b32.xlu0 %v1429, 112
      %v1438 = vpop.permute.xlu0 %1437
      %1439 = vrot.lane.b32.xlu0 %v1424, 112
      %v1440 = vpop.permute.xlu0 %1439
      %1441 = vrot.lane.b32.xlu0 %v1426, 112
      %v1442 = vpop.permute.xlu0 %1441
      %1443 = vrot.lane.b32.xlu0 %v1428, 112
      %v1444 = vpop.permute.xlu0 %1443
      %1445 = vrot.lane.b32.xlu0 %v1430, 112
      %v1446 = vpop.permute.xlu0 %1445
      %vm1447 = vcmp.lt.s32.totalorder %v1095, 112
      %v1448 = vsel %vm1447, %v1432, %v1440
      %v1449 = vsel %vm1447, %v1434, %v1442
      %v1450 = vsel %vm1447, %v1436, %v1444
      %v1451 = vsel %vm1447, %v1438, %v1446
      %v1452 = vsel %vm1447, %v1440, %v1432
      %v1453 = vsel %vm1447, %v1442, %v1434
      %v1454 = vsel %vm1447, %v1444, %v1436
      %v1455 = vsel %vm1447, %v1446, %v1438
      %v1456 = vsel %vm1101, %v1448, 0.0
      %v1457 = vsel %vm1102, %v1452, 0.0
      %v1458 = vsel %vm1101, %v1449, 0.0
      %v1459 = vsel %vm1102, %v1453, 0.0
      %v1460 = vsel %vm1101, %v1450, 0.0
      %v1461 = vsel %vm1102, %v1454, 0.0
      %v1462 = vsel %vm1101, %v1451, 0.0
      %v1463 = vsel %vm1102, %v1455, 0.0
      %v1464 = vadd.f32 %v1415, %v1456
      %v1465 = vadd.f32 %v1416, %v1457
      %v1466 = vadd.f32 %v1417, %v1458
      %v1467 = vadd.f32 %v1418, %v1459
      %v1468 = vadd.f32 %v1419, %v1460
      %v1469 = vadd.f32 %v1420, %v1461
      %v1470 = vadd.f32 %v1421, %v1462
      %v1471 = vadd.f32 %v1422, %v1463
      %v1472 = vld [vmem:[#allocation2 + $0x200] sm:$0xff]
      %v1473 = vld [vmem:[#allocation2 + $0x208] sm:$0xff]
      %v1474 = vld [vmem:[#allocation2 + $0x210] sm:$0xff]
      %v1475 = vld [vmem:[#allocation2 + $0x218] sm:$0xff]
      %v1476 = vld [vmem:[#allocation2 + $0x220] sm:$0xff]
      %v1477 = vld [vmem:[#allocation2 + $0x228] sm:$0xff]
      %v1478 = vld [vmem:[#allocation2 + $0x230] sm:$0xff]
      %v1479 = vld [vmem:[#allocation2 + $0x238] sm:$0xff]
      %1480 = vrot.lane.b32.xlu0 %v1472, 111
      %v1481 = vpop.permute.xlu0 %1480
      %1482 = vrot.lane.b32.xlu0 %v1474, 111
      %v1483 = vpop.permute.xlu0 %1482
      %1484 = vrot.lane.b32.xlu0 %v1476, 111
      %v1485 = vpop.permute.xlu0 %1484
      %1486 = vrot.lane.b32.xlu0 %v1478, 111
      %v1487 = vpop.permute.xlu0 %1486
      %1488 = vrot.lane.b32.xlu0 %v1473, 111
      %v1489 = vpop.permute.xlu0 %1488
      %1490 = vrot.lane.b32.xlu0 %v1475, 111
      %v1491 = vpop.permute.xlu0 %1490
      %1492 = vrot.lane.b32.xlu0 %v1477, 111
      %v1493 = vpop.permute.xlu0 %1492
      %1494 = vrot.lane.b32.xlu0 %v1479, 111
      %v1495 = vpop.permute.xlu0 %1494
      %vm1496 = vcmp.lt.s32.totalorder %v1095, 111
      %v1497 = vsel %vm1496, %v1481, %v1489
      %v1498 = vsel %vm1496, %v1483, %v1491
      %v1499 = vsel %vm1496, %v1485, %v1493
      %v1500 = vsel %vm1496, %v1487, %v1495
      %v1501 = vsel %vm1496, %v1489, %v1481
      %v1502 = vsel %vm1496, %v1491, %v1483
      %v1503 = vsel %vm1496, %v1493, %v1485
      %v1504 = vsel %vm1496, %v1495, %v1487
      %vm1505 = vmand %vm1101, %vm1105
      %vm1506 = vmand %vm1102, %vm1106
      %v1507 = vsel %vm1505, %v1497, 0.0
      %v1508 = vsel %vm1506, %v1501, 0.0
      %v1509 = vsel %vm1505, %v1498, 0.0
      %v1510 = vsel %vm1506, %v1502, 0.0
      %v1511 = vsel %vm1505, %v1499, 0.0
      %v1512 = vsel %vm1506, %v1503, 0.0
      %v1513 = vsel %vm1505, %v1500, 0.0
      %v1514 = vsel %vm1506, %v1504, 0.0
      %v1515 = vadd.f32 %v1464, %v1507
      %v1516 = vadd.f32 %v1465, %v1508
      %v1517 = vadd.f32 %v1466, %v1509
      %v1518 = vadd.f32 %v1467, %v1510
      %v1519 = vadd.f32 %v1468, %v1511
      %v1520 = vadd.f32 %v1469, %v1512
      %v1521 = vadd.f32 %v1470, %v1513
      %v1522 = vadd.f32 %v1471, %v1514
      %v1523 = vld [vmem:[%s6] sm:$0xff]
      %v1524 = vld [vmem:[%s6 + $0x8] sm:$0xff]
      %v1525 = vld [vmem:[%s6 + $0x10] sm:$0xff]
      %v1526 = vld [vmem:[%s6 + $0x18] sm:$0xff]
      %1528 = vset.pattern.permute.xlu0 0
      %1529 = vperm.xlu0 %1528, %v1523
      %v1530 = vpop.permute.xlu0 %1529
      %1533 = vset.pattern.permute.xlu0 0
      %1534 = vperm.xlu0 %1533, %v1524
      %v1535 = vpop.permute.xlu0 %1534
      %1538 = vset.pattern.permute.xlu0 0
      %1539 = vperm.xlu0 %1538, %v1525
      %v1540 = vpop.permute.xlu0 %1539
      %1543 = vset.pattern.permute.xlu0 0
      %1544 = vperm.xlu0 %1543, %v1526
      %v1545 = vpop.permute.xlu0 %1544
      %v1547 = vadd.f32 %v1515, %v1530
      %v1548 = vadd.f32 %v1516, %v1530
      %v1549 = vadd.f32 %v1517, %v1535
      %v1550 = vadd.f32 %v1518, %v1535
      %v1551 = vadd.f32 %v1519, %v1540
      %v1552 = vadd.f32 %v1520, %v1540
      %v1553 = vadd.f32 %v1521, %v1545
      %v1554 = vadd.f32 %v1522, %v1545
      %vm1563 = vcmask 1043456
      %v1564 = vrot.slane %v1547, 4
      %v1565 = vrot.slane %v1548, 4
      %v1566 = vrot.slane %v1549, 4
      %v1567 = vsel %vm1563, %v1564, %v1566
      %v1568 = vrot.slane %v1550, 4
      %v1569 = vsel %vm1563, %v1565, %v1568
      %v1570 = vrot.slane %v1551, 4
      %v1571 = vsel %vm1563, %v1566, %v1570
      %v1572 = vrot.slane %v1552, 4
      %v1573 = vsel %vm1563, %v1568, %v1572
      %v1574 = vrot.slane %v1553, 4
      %v1575 = vsel %vm1563, %v1570, %v1574
      %v1576 = vrot.slane %v1554, 4
      %v1577 = vsel %vm1563, %v1572, %v1576
      %1588 = vst [vmem:[%s278] sm:$0xf0] %v1564
      %1589 = vst [vmem:[%s278 + $0x8] sm:$0xf0] %v1565
      %1590 = vst [vmem:[%s278 + $0x10] sm:$0xff] %v1567
      %1591 = vst [vmem:[%s278 + $0x18] sm:$0xff] %v1569
      %1592 = vst [vmem:[%s278 + $0x20] sm:$0xff] %v1571
      %1593 = vst [vmem:[%s278 + $0x28] sm:$0xff] %v1573
      %1594 = vst [vmem:[%s278 + $0x30] sm:$0xff] %v1575
      %1595 = vst [vmem:[%s278 + $0x38] sm:$0xff] %v1577
      %1596 = vst [vmem:[%s278 + $0x40] sm:$0xf] %v1574
      %1597 = vst [vmem:[%s278 + $0x48] sm:$0xf] %v1576
      %p1598 = scmp.lt.s32.totalorder %s18, 1
      %s1599 = scalar_select %p1598, %s18, 1
      %s1600 = smul.addr %s1599, 10
      %s1601 = smul.addr %s1600, 8
      %s1602 = scalar_lea.vmem %s7, %s1601
      // Predicated region
      $region49: #{tpu_custom_call.1} parent=47 // pred_check
        %p1603 = pneg %p188
      $region50: #{tpu_custom_call.1} parent=47 // pred_check_branch
        %1605 = sbr.rel (%p1603) target = $region52
      $region51: #{tpu_custom_call.1} parent=47 // pred_region
        _
      $region52: #{tpu_custom_call.1} parent=47 // pred_fallthru
        _
    $region48: #{tpu_custom_call.1} parent=5 // pred_fallthru
      _
    %p1606 = scmp.le.s32.totalorder 2, %s13
    // Predicated region
    $region53: #{tpu_custom_call.1} parent=5 // pred_check
      %p1607 = pneg %p1606
    $region54: #{tpu_custom_call.1} parent=5 // pred_check_branch
      %1609 = sbr.rel (%p1607) target = $region56
    $region55: #{tpu_custom_call.1} parent=5 // pred_region
      %s1610 = ssub.s32 %s13, 2
      // Predicated region
      $region57: #{tpu_custom_call.1} parent=55 // pred_check
        %p1611 = pneg %p194
      $region58: #{tpu_custom_call.1} parent=55 // pred_check_branch
        %1613 = sbr.rel (%p1611) target = $region60
      $region59: #{tpu_custom_call.1} parent=55 // pred_region
        %p1614 = scmp.lt.s32.totalorder %s19, 1
        %s1615 = scalar_select %p1614, %s19, 1
        %s1616 = smul.addr %s1615, 10
        %s1617 = smul.addr %s1616, 8
        %s1618 = scalar_lea.vmem %s7, %s1617
      $region60: #{tpu_custom_call.1} parent=55 // pred_fallthru
        _
    $region56: #{tpu_custom_call.1} parent=5 // pred_fallthru
      _
  $region6: #{tpu_custom_call.1} parent=0 // loop_footer
    %s17 = sadd.s32 1, %s13
  $region7: #{tpu_custom_call.1} parent=0 // loop_footer_branch
    %12 = sbr.rel target = $region3
  $region8: #{tpu_custom_call.1} parent=0 // loop_exit
    _

</llo_original>
